<compile_context>
chip_gen: v5e
topology: v5e:2x2
jax: 0.10.0
libtpu: 0.0.40
codegen_flags: <defaults>
</compile_context>

<pallas_src>
import random

import jax
import jax.numpy as jnp
from jax.experimental import pallas as pl
from jax.experimental.pallas import tpu as pltpu

# ---------------- small deterministic hyper-params ----------------
SEQ_LEN = 8          # encoder source length
TRG_LEN = 8          # decoder target length
BATCH = 2
VOCAB = 16           # input_size == output_size (token ids feed back into embed)
EMBED = 16           # embed_dim
HIDDEN = 32          # hidden_size
NLAYERS = 2          # num_layers
ATTN = 32            # attention_hidden
TEACHER_FORCE_RATIO = 0.5


# ------------------------- fused Pallas kernel ---------------------------
def fused_decoder_kernel(tf_ref,                      # SMEM (T,) int32  (scalar prefetch)
                         tgt_ref,                     # (1, B, 1) int32  target[:, t]
                         enc_ref,                     # (B, S, H)  resident
                         kpre_ref,                    # (B, S, A)  resident (Wk(enc)+bk)
                         h0_ref,                      # (L, B, H)  encoder final hidden
                         embed_ref,                   # (V, E)     decoder embedding
                         wq_ref, bq_ref,              # (H, A), (1, A)
                         wv_ref, bv_ref,              # (1, 1, A), (1, 1, 1)
                         wih0e_ref, wih0c_ref,        # (E, H), (H, H)   layer-0 input weights
                         wihup_ref,                   # (L-1, H, H)      upper-layer input weights
                         whh_ref, bih_ref, bhh_ref,   # (L, H, H), (L, 1, H), (L, 1, H)
                         wfc_ref, bfc_ref,            # (H, O), (1, O)
                         pred_ref,                    # out: (1, B, O)
                         h_sc, tok_sc):               # scratch: (L, B, H) f32, (B, 1) i32
    t = pl.program_id(0)
    B, S, H = enc_ref.shape
    A = kpre_ref.shape[2]
    L = h0_ref.shape[0]
    V, E = embed_ref.shape
    O = wfc_ref.shape[1]

    tgt_col = tgt_ref[0]                               # (B, 1) int32 == target[t]

    # ---- step-0 prologue: hidden <- encoder hidden, input token <- target[0] ----
    @pl.when(t == 0)
    def _init():
        h_sc[...] = h0_ref[...]
        tok_sc[...] = tgt_col

    # ---- embedding lookup via one-hot matmul (table is VMEM-resident) ----
    col = jax.lax.broadcasted_iota(jnp.int32, (B, V), 1)
    onehot = (tok_sc[...] == col).astype(jnp.float32)              # (B, V)
    emb = jnp.dot(onehot, embed_ref[...],
                  preferred_element_type=jnp.float32)              # (B, E)

    # ---- additive (Bahdanau) attention; K precomputed outside the loop ----
    q_in = h_sc[L - 1]                                             # hidden[-1]  (B, H)
    Q = jnp.dot(q_in, wq_ref[...],
                preferred_element_type=jnp.float32) + bq_ref[...]  # (B, A)
    score = jnp.tanh(kpre_ref[...] + Q[:, None, :])                # (B, S, A)
    wv_b = jnp.broadcast_to(wv_ref[...], (B, 1, A))                # (B, 1, A)
    logits = jnp.einsum('boa,bsa->bos', wv_b, score,
                        preferred_element_type=jnp.float32) + bv_ref[...]   # (B, 1, S)
    m = jnp.max(logits, axis=-1, keepdims=True)
    e = jnp.exp(logits - m)
    alpha = e / jnp.sum(e, axis=-1, keepdims=True)                 # softmax over seq
    context = jnp.einsum('bos,bsh->boh', alpha, enc_ref[...],
                         preferred_element_type=jnp.float32)[:, 0, :]       # (B, H)

    # ---- multi-layer tanh RNN step, layer-0 input = [embed, context] ----
    # TODO(synk): `RNN` class is undefined in the source file; assumed
    #             nn.RNN-like multi-layer tanh RNN (not GRU/LSTM).
    gate0 = (jnp.dot(emb, wih0e_ref[...], preferred_element_type=jnp.float32)
             + jnp.dot(context, wih0c_ref[...], preferred_element_type=jnp.float32)
             + bih_ref[0]
             + jnp.dot(h_sc[0], whh_ref[0], preferred_element_type=jnp.float32)
             + bhh_ref[0])
    last = jnp.tanh(gate0)                                         # (B, H)
    h_sc[0] = last
    for l in range(1, L):                                          # upper layers: true (H,H) weights
        gate = (jnp.dot(last, wihup_ref[l - 1], preferred_element_type=jnp.float32)
                + bih_ref[l]
                + jnp.dot(h_sc[l], whh_ref[l], preferred_element_type=jnp.float32)
                + bhh_ref[l])
        last = jnp.tanh(gate)
        h_sc[l] = last

    # ---- output projection (fc) ----
    pred = (jnp.dot(last, wfc_ref[...],
                    preferred_element_type=jnp.float32) + bfc_ref[...])     # (B, O)
    pred_ref[0] = pred

    # ---- next input token: argmax (first-max index) vs teacher forcing ----
    mx = jnp.max(pred, axis=-1, keepdims=True)                     # (B, 1)
    cols = jax.lax.broadcasted_iota(jnp.int32, (B, O), 1)
    top1 = jnp.min(jnp.where(pred == mx, cols, O),
                   axis=-1, keepdims=True)                         # (B, 1) int32

    tf_t = tf_ref[t]

    @pl.when(tf_t > 0)
    def _teacher():
        tok_sc[...] = tgt_col

    @pl.when(tf_t == 0)
    def _greedy():
        tok_sc[...] = top1


def run_decoder(tf_flags, targets_3d, enc_bsh, k_pre, enc_hidden, p):
    T, B, _ = targets_3d.shape
    _, S, H = enc_bsh.shape
    A = k_pre.shape[2]
    L = enc_hidden.shape[0]
    V, E = p['dec_embed'].shape
    O = p['w_fc'].shape[1]

    def resident(shape):
        nd = len(shape)
        return pl.BlockSpec(shape, lambda t, tf, nd=nd: (0,) * nd)

    in_specs = [
        pl.BlockSpec((1, B, 1), lambda t, tf: (t, 0, 0)),          # target[:, t]
        resident((B, S, H)),                                       # enc_output (B,S,H)
        resident((B, S, A)),                                       # K (hoisted)
        resident((L, B, H)),                                       # encoder hidden
        resident((V, E)),                                          # dec embedding table
        resident((H, A)), resident((1, A)),                        # Wq, bq
        resident((1, 1, A)), resident((1, 1, 1)),                  # Wv, bv
        resident((E, H)), resident((H, H)),                        # Wih0 (embed part / context part)
        resident((L - 1, H, H)),                                   # Wih upper layers
        resident((L, H, H)),                                       # Whh
        resident((L, 1, H)), resident((L, 1, H)),                  # b_ih, b_hh
        resident((H, O)), resident((1, O)),                        # Wfc, bfc
    ]
    out_specs = pl.BlockSpec((1, B, O), lambda t, tf: (t, 0, 0))

    grid_spec = pltpu.PrefetchScalarGridSpec(
        num_scalar_prefetch=1,
        grid=(T,),
        in_specs=in_specs,
        out_specs=out_specs,
        scratch_shapes=[pltpu.VMEM((L, B, H), jnp.float32),        # carried hidden
                        pltpu.VMEM((B, 1), jnp.int32)])            # carried input token

    preds = pl.pallas_call(
        fused_decoder_kernel,
        out_shape=jax.ShapeDtypeStruct((T, B, O), jnp.float32),
        grid_spec=grid_spec,
        compiler_params=pltpu.CompilerParams(
            dimension_semantics=("arbitrary",)),                   # strictly sequential carry
    )(tf_flags, targets_3d, enc_bsh, k_pre, enc_hidden, p['dec_embed'],
      p['w_q'], p['b_q'], p['w_v'], p['b_v'],
      p['w_ih0_e'], p['w_ih0_c'], p['w_ih_up'],
      p['w_hh'], p['b_ih'], p['b_hh'],
      p['w_fc'], p['b_fc'])
    return preds


# ------------------------- parameters ------------------------------
def init_params(seed=0):
    keys = iter(jax.random.split(jax.random.PRNGKey(seed), 64))
    nk = lambda shape: jax.random.normal(next(keys), shape, dtype=jnp.float32) * 0.1
    p = {}
    # encoder: embedding + L-layer tanh RNN
    p['enc_embed'] = nk((VOCAB, EMBED))
    p['enc_wih'] = [nk((EMBED if l == 0 else HIDDEN, HIDDEN)) for l in range(NLAYERS)]
    p['enc_whh'] = [nk((HIDDEN, HIDDEN)) for _ in range(NLAYERS)]
    p['enc_bih'] = [nk((HIDDEN,)) for _ in range(NLAYERS)]
    p['enc_bhh'] = [nk((HIDDEN,)) for _ in range(NLAYERS)]
    # decoder embedding
    p['dec_embed'] = nk((VOCAB, EMBED))
    # attention: Wk/Wq hidden->attn ; Wv attn->1 stored as (1,1,A) for in-kernel broadcast
    p['w_k'] = nk((HIDDEN, ATTN)); p['b_k'] = nk((1, ATTN))
    p['w_q'] = nk((HIDDEN, ATTN)); p['b_q'] = nk((1, ATTN))
    p['w_v'] = nk((1, 1, ATTN));   p['b_v'] = nk((1, 1, 1))
    # decoder RNN: layer-0 input = [embed, context] split into two matrices;
    # upper layers take H inputs (no zero padding).
    p['w_ih0_e'] = nk((EMBED, HIDDEN))
    p['w_ih0_c'] = nk((HIDDEN, HIDDEN))
    p['w_ih_up'] = jnp.stack([nk((HIDDEN, HIDDEN)) for _ in range(NLAYERS - 1)])
    p['w_hh'] = jnp.stack([nk((HIDDEN, HIDDEN)) for _ in range(NLAYERS)])
    p['b_ih'] = jnp.stack([nk((1, HIDDEN)) for _ in range(NLAYERS)])
    p['b_hh'] = jnp.stack([nk((1, HIDDEN)) for _ in range(NLAYERS)])
    # output fc
    p['w_fc'] = nk((HIDDEN, VOCAB)); p['b_fc'] = nk((1, VOCAB))
    return p


# -------------------- jitted glue (encoder + K hoist + fused decode) --------------------
def encoder_forward(tokens, p):
    """tokens: (S, B) int32 -> enc_output (S, B, H), enc_hidden (L, B, H)."""
    # TODO(synk): encoder recurrence kept as (jitted) XLA glue; it could be fused
    #             into a second grid=(S,) Pallas kernel the same way as the decoder.
    S, _ = tokens.shape
    emb = p['enc_embed'][tokens]                                   # (S, B, E)
    h = [jnp.zeros((tokens.shape[1], HIDDEN), jnp.float32) for _ in range(NLAYERS)]
    outs = []
    for s in range(S):
        x = emb[s]
        for l in range(NLAYERS):
            h[l] = jnp.tanh(x @ p['enc_wih'][l] + p['enc_bih'][l]
                            + h[l] @ p['enc_whh'][l] + p['enc_bhh'][l])
            x = h[l]
        outs.append(h[-1])
    return jnp.stack(outs, axis=0), jnp.stack(h, axis=0)


@jax.jit
def attention_decoder_forward(x, target, tf_flags, p):
    """Mirrors AttentionDecoder.forward: returns (trglen, 1, B, output_size)."""
    enc_output, enc_hidden = encoder_forward(x, p)                 # (S,B,H), (L,B,H)
    enc_bsh = jnp.transpose(enc_output, (1, 0, 2))                 # (B, S, H)
    # Hoisted, loop-invariant attention key projection.
    k_pre = jnp.einsum('bsh,ha->bsa', enc_bsh, p['w_k']) + p['b_k']  # (B, S, A)
    targets_3d = target[..., None].astype(jnp.int32)               # (T, B, 1)
    preds = run_decoder(tf_flags, targets_3d, enc_bsh, k_pre, enc_hidden, p)
    return preds[:, None, :, :]                                    # (T, 1, B, O)


# -------------------- pure-JAX reference for correctness ---------------------
def reference_forward(x, target, tf_flags, p):
    enc_output, enc_hidden = encoder_forward(x, p)
    enc_bsh = jnp.transpose(enc_output, (1, 0, 2))
    K = jnp.einsum('bsh,ha->bsa', enc_bsh, p['w_k']) + p['b_k']
    hidden = enc_hidden
    tok = target[0]
    preds = []
    for t in range(target.shape[0]):
        emb = p['dec_embed'][tok]                                  # (B, E)
        Q = hidden[-1] @ p['w_q'] + p['b_q']
        score = jnp.tanh(K + Q[:, None, :])
        logits = jnp.einsum('bsa,a->bs', score, p['w_v'][0, 0]) + p['b_v'][0, 0, 0]
        alpha = jax.nn.softmax(logits, axis=-1)
        context = jnp.einsum('bs,bsh->bh', alpha, enc_bsh)
        h_list = []
        last = jnp.tanh(emb @ p['w_ih0_e'] + context @ p['w_ih0_c'] + p['b_ih'][0]
                        + hidden[0] @ p['w_hh'][0] + p['b_hh'][0])
        h_list.append(last)
        for l in range(1, NLAYERS):
            last = jnp.tanh(last @ p['w_ih_up'][l - 1] + p['b_ih'][l]
                            + hidden[l] @ p['w_hh'][l] + p['b_hh'][l])
            h_list.append(last)
        hidden = jnp.stack(h_list, axis=0)
        pred = last @ p['w_fc'] + p['b_fc']
        preds.append(pred[None])
        top1 = jnp.argmax(pred, axis=-1).astype(target.dtype)
        tok = jnp.where(tf_flags[t] > 0, target[t], top1)
    return jnp.stack(preds, axis=0)                                # (T, 1, B, O)


if __name__ == "__main__":
    params = init_params(0)
    kx, kt = jax.random.split(jax.random.PRNGKey(0))
    x = jax.random.randint(kx, (SEQ_LEN, BATCH), 0, VOCAB, dtype=jnp.int32)
    target = jax.random.randint(kt, (TRG_LEN, BATCH), 0, VOCAB, dtype=jnp.int32)

    # deterministic stand-in for random.random() teacher forcing, hoisted out of
    # the trace and passed to the kernel as int32 flags (scalar prefetch / SMEM).
    rng = random.Random(0)
    tf_flags = jnp.array([1 if rng.random() < TEACHER_FORCE_RATIO else 0
                          for _ in range(TRG_LEN)], dtype=jnp.int32)

    out = attention_decoder_forward(x, target, tf_flags, params)
    out = jax.block_until_ready(out)
    assert out.shape == (TRG_LEN, 1, BATCH, VOCAB), out.shape
    assert bool(jnp.all(jnp.isfinite(out)))

    ref = reference_forward(x, target, tf_flags, params)
    assert bool(jnp.allclose(out, ref, atol=1e-3, rtol=1e-3)), \
        float(jnp.max(jnp.abs(out - ref)))

    print("KERNEL_OK")
</pallas_src>

<mosaic_0001>
module attributes {stable_mosaic.version = 11 : i64} {
  func.func @fused_decoder_kernel(%arg0: i32, %arg1: memref<8xi32, #tpu.memory_space<smem>>, %arg2: memref<1x2x1xi32, #tpu.memory_space<vmem>>, %arg3: memref<2x8x32xf32, #tpu.memory_space<vmem>>, %arg4: memref<2x8x32xf32, #tpu.memory_space<vmem>>, %arg5: memref<2x2x32xf32, #tpu.memory_space<vmem>>, %arg6: memref<16x16xf32, #tpu.memory_space<vmem>>, %arg7: memref<32x32xf32, #tpu.memory_space<vmem>>, %arg8: memref<1x32xf32, #tpu.memory_space<vmem>>, %arg9: memref<1x1x32xf32, #tpu.memory_space<vmem>>, %arg10: memref<1x1x1xf32, #tpu.memory_space<vmem>>, %arg11: memref<16x32xf32, #tpu.memory_space<vmem>>, %arg12: memref<32x32xf32, #tpu.memory_space<vmem>>, %arg13: memref<1x32x32xf32, #tpu.memory_space<vmem>>, %arg14: memref<2x32x32xf32, #tpu.memory_space<vmem>>, %arg15: memref<2x1x32xf32, #tpu.memory_space<vmem>>, %arg16: memref<2x1x32xf32, #tpu.memory_space<vmem>>, %arg17: memref<32x16xf32, #tpu.memory_space<vmem>>, %arg18: memref<1x16xf32, #tpu.memory_space<vmem>>, %arg19: memref<1x2x16xf32, #tpu.memory_space<vmem>>, %arg20: memref<2x2x32xf32, #tpu.memory_space<vmem>>, %arg21: memref<2x1xi32, #tpu.memory_space<vmem>>) attributes {dimension_semantics = [#tpu.dimension_semantics<arbitrary>], iteration_bounds = array<i64: 8>, scalar_prefetch = 1 : i64, scratch_operands = 2 : i64, tpu.core_type = #tpu.core_type<tc>, window_params = [{transform_indices = @transform_0, window_bounds = array<i64: 1, 2, 1>}, {pipeline_mode = #tpu.pipeline_mode<synchronous>, transform_indices = @transform_1, window_bounds = array<i64: 2, 8, 32>}, {pipeline_mode = #tpu.pipeline_mode<synchronous>, transform_indices = @transform_2, window_bounds = array<i64: 2, 8, 32>}, {pipeline_mode = #tpu.pipeline_mode<synchronous>, transform_indices = @transform_3, window_bounds = array<i64: 2, 2, 32>}, {pipeline_mode = #tpu.pipeline_mode<synchronous>, transform_indices = @transform_4, window_bounds = array<i64: 16, 16>}, {pipeline_mode = #tpu.pipeline_mode<synchronous>, transform_indices = @transform_5, window_bounds = array<i64: 32, 32>}, {pipeline_mode = #tpu.pipeline_mode<synchronous>, transform_indices = @transform_6, window_bounds = array<i64: 1, 32>}, {pipeline_mode = #tpu.pipeline_mode<synchronous>, transform_indices = @transform_7, window_bounds = array<i64: 1, 1, 32>}, {pipeline_mode = #tpu.pipeline_mode<synchronous>, transform_indices = @transform_8, window_bounds = array<i64: 1, 1, 1>}, {pipeline_mode = #tpu.pipeline_mode<synchronous>, transform_indices = @transform_9, window_bounds = array<i64: 16, 32>}, {pipeline_mode = #tpu.pipeline_mode<synchronous>, transform_indices = @transform_10, window_bounds = array<i64: 32, 32>}, {pipeline_mode = #tpu.pipeline_mode<synchronous>, transform_indices = @transform_11, window_bounds = array<i64: 1, 32, 32>}, {pipeline_mode = #tpu.pipeline_mode<synchronous>, transform_indices = @transform_12, window_bounds = array<i64: 2, 32, 32>}, {pipeline_mode = #tpu.pipeline_mode<synchronous>, transform_indices = @transform_13, window_bounds = array<i64: 2, 1, 32>}, {pipeline_mode = #tpu.pipeline_mode<synchronous>, transform_indices = @transform_14, window_bounds = array<i64: 2, 1, 32>}, {pipeline_mode = #tpu.pipeline_mode<synchronous>, transform_indices = @transform_15, window_bounds = array<i64: 32, 16>}, {pipeline_mode = #tpu.pipeline_mode<synchronous>, transform_indices = @transform_16, window_bounds = array<i64: 1, 16>}, {transform_indices = @transform_17, window_bounds = array<i64: 1, 2, 16>}]} {
    %c0 = arith.constant 0 : index
    %c0_0 = arith.constant 0 : index
    %c0_1 = arith.constant 0 : index
    %0 = vector.load %arg2[%c0, %c0_0, %c0_1] : memref<1x2x1xi32, #tpu.memory_space<vmem>>, vector<1x2x1xi32>
    %1 = vector.shape_cast %0 : vector<1x2x1xi32> to vector<2x1xi32>
    %c0_i32 = arith.constant 0 : i32
    %2 = arith.cmpi eq, %arg0, %c0_i32 : i32
    %3 = arith.extui %2 : i1 to i32
    %c0_i32_2 = arith.constant 0 : i32
    %4 = arith.cmpi ne, %3, %c0_i32_2 : i32
    scf.if %4 {
      %c0_86 = arith.constant 0 : index
      %c0_87 = arith.constant 0 : index
      %c0_88 = arith.constant 0 : index
      %113 = vector.load %arg5[%c0_86, %c0_87, %c0_88] : memref<2x2x32xf32, #tpu.memory_space<vmem>>, vector<2x2x32xf32>
      %c0_89 = arith.constant 0 : index
      %c0_90 = arith.constant 0 : index
      %c0_91 = arith.constant 0 : index
      %114 = vector.load %arg20[%c0_89, %c0_90, %c0_91] : memref<2x2x32xf32, #tpu.memory_space<vmem>>, vector<2x2x32xf32>
      tpu.vector_store %arg20[%c0_89, %c0_90, %c0_91], %113 {strides = array<i32>} : memref<2x2x32xf32, #tpu.memory_space<vmem>>, vector<2x2x32xf32>,
      %c0_92 = arith.constant 0 : index
      %c0_93 = arith.constant 0 : index
      %115 = vector.load %arg21[%c0_92, %c0_93] : memref<2x1xi32, #tpu.memory_space<vmem>>, vector<2x1xi32>
      tpu.vector_store %arg21[%c0_92, %c0_93], %1 {strides = array<i32>} : memref<2x1xi32, #tpu.memory_space<vmem>>, vector<2x1xi32>,
    } else {
    }
    %5 = tpu.iota {dimensions = array<i32: 1>} : vector<2x16xi32>
    %c0_3 = arith.constant 0 : index
    %c0_4 = arith.constant 0 : index
    %6 = vector.load %arg21[%c0_3, %c0_4] : memref<2x1xi32, #tpu.memory_space<vmem>>, vector<2x1xi32>
    %7 = vector.broadcast %6 : vector<2x1xi32> to vector<2x16xi32>
    %8 = arith.cmpi eq, %7, %5 : vector<2x16xi32>
    %9 = arith.extui %8 : vector<2x16xi1> to vector<2x16xi32>
    %10 = arith.sitofp %9 : vector<2x16xi32> to vector<2x16xf32>
    %c0_5 = arith.constant 0 : index
    %c0_6 = arith.constant 0 : index
    %11 = vector.load %arg6[%c0_5, %c0_6] : memref<16x16xf32, #tpu.memory_space<vmem>>, vector<16x16xf32>
    %cst = arith.constant dense<0.000000e+00> : vector<2x16xf32>
    %12 = tpu.matmul %10, %11, %cst {dimension_numbers = #tpu.dot_dimension_numbers<[1], [0], [0], [1], [0, 0, 1, 1], [], []>} : vector<2x16xf32>, vector<16x16xf32>, vector<2x16xf32> -> vector<2x16xf32>
    %c1 = arith.constant 1 : index
    %c0_7 = arith.constant 0 : index
    %c0_8 = arith.constant 0 : index
    %13 = vector.load %arg20[%c1, %c0_7, %c0_8] : memref<2x2x32xf32, #tpu.memory_space<vmem>>, vector<1x2x32xf32>
    %14 = vector.shape_cast %13 : vector<1x2x32xf32> to vector<2x32xf32>
    %c0_9 = arith.constant 0 : index
    %c0_10 = arith.constant 0 : index
    %15 = vector.load %arg7[%c0_9, %c0_10] : memref<32x32xf32, #tpu.memory_space<vmem>>, vector<32x32xf32>
    %cst_11 = arith.constant dense<0.000000e+00> : vector<2x32xf32>
    %16 = tpu.matmul %14, %15, %cst_11 {dimension_numbers = #tpu.dot_dimension_numbers<[1], [0], [0], [1], [0, 0, 1, 1], [], []>} : vector<2x32xf32>, vector<32x32xf32>, vector<2x32xf32> -> vector<2x32xf32>
    %c0_12 = arith.constant 0 : index
    %c0_13 = arith.constant 0 : index
    %17 = vector.load %arg8[%c0_12, %c0_13] : memref<1x32xf32, #tpu.memory_space<vmem>>, vector<1x32xf32>
    %18 = vector.broadcast %17 : vector<1x32xf32> to vector<2x32xf32>
    %19 = arith.addf %16, %18 : vector<2x32xf32>
    %c0_14 = arith.constant 0 : index
    %c0_15 = arith.constant 0 : index
    %c0_16 = arith.constant 0 : index
    %20 = vector.load %arg4[%c0_14, %c0_15, %c0_16] : memref<2x8x32xf32, #tpu.memory_space<vmem>>, vector<2x8x32xf32>
    %21 = vector.shape_cast %19 : vector<2x32xf32> to vector<2x1x32xf32>
    %22 = vector.broadcast %21 : vector<2x1x32xf32> to vector<2x8x32xf32>
    %23 = arith.addf %20, %22 : vector<2x8x32xf32>
    %24 = math.tanh %23 : vector<2x8x32xf32>
    %c0_17 = arith.constant 0 : index
    %c0_18 = arith.constant 0 : index
    %c0_19 = arith.constant 0 : index
    %25 = vector.load %arg9[%c0_17, %c0_18, %c0_19] : memref<1x1x32xf32, #tpu.memory_space<vmem>>, vector<1x1x32xf32>
    %26 = vector.shape_cast %25 : vector<1x1x32xf32> to vector<1x1x32xf32>
    %27 = vector.broadcast %26 : vector<1x1x32xf32> to vector<2x1x32xf32>
    "tpu.trace_start"() <{level = 10 : i32, message = "boa,bsa->bos"}> : () -> ()
    %cst_20 = arith.constant dense<0.000000e+00> : vector<2x1x8xf32>
    %28 = tpu.matmul %27, %24, %cst_20 {dimension_numbers = #tpu.dot_dimension_numbers<[2], [2], [1], [1], [0, 0, 0, 1, 1, 1], [0], [0]>} : vector<2x1x32xf32>, vector<2x8x32xf32>, vector<2x1x8xf32> -> vector<2x1x8xf32>
    "tpu.trace_stop"() : () -> ()
    %c0_21 = arith.constant 0 : index
    %c0_22 = arith.constant 0 : index
    %c0_23 = arith.constant 0 : index
    %29 = vector.load %arg10[%c0_21, %c0_22, %c0_23] : memref<1x1x1xf32, #tpu.memory_space<vmem>>, vector<1x1x1xf32>
    %30 = vector.broadcast %29 : vector<1x1x1xf32> to vector<2x1x8xf32>
    %31 = arith.addf %28, %30 : vector<2x1x8xf32>
    %cst_24 = arith.constant dense<0xFF800000> : vector<2x1xf32>
    %32 = vector.multi_reduction <maximumf>, %31, %cst_24 [2] : vector<2x1x8xf32> to vector<2x1xf32>
    %33 = vector.shape_cast %32 : vector<2x1xf32> to vector<2x1x1xf32>
    %34 = vector.broadcast %33 : vector<2x1x1xf32> to vector<2x1x8xf32>
    %35 = arith.subf %31, %34 : vector<2x1x8xf32>
    %36 = math.exp %35 : vector<2x1x8xf32>
    %cst_25 = arith.constant dense<0.000000e+00> : vector<2x1xf32>
    %37 = vector.multi_reduction <add>, %36, %cst_25 [2] : vector<2x1x8xf32> to vector<2x1xf32>
    %38 = vector.shape_cast %37 : vector<2x1xf32> to vector<2x1x1xf32>
    %39 = vector.broadcast %38 : vector<2x1x1xf32> to vector<2x1x8xf32>
    %40 = arith.divf %36, %39 : vector<2x1x8xf32>
    %c0_26 = arith.constant 0 : index
    %c0_27 = arith.constant 0 : index
    %c0_28 = arith.constant 0 : index
    %41 = vector.load %arg3[%c0_26, %c0_27, %c0_28] : memref<2x8x32xf32, #tpu.memory_space<vmem>>, vector<2x8x32xf32>
    "tpu.trace_start"() <{level = 10 : i32, message = "bos,bsh->boh"}> : () -> ()
    %cst_29 = arith.constant dense<0.000000e+00> : vector<2x1x32xf32>
    %42 = tpu.matmul %40, %41, %cst_29 {dimension_numbers = #tpu.dot_dimension_numbers<[2], [1], [1], [2], [0, 0, 0, 1, 1, 2], [0], [0]>} : vector<2x1x8xf32>, vector<2x8x32xf32>, vector<2x1x32xf32> -> vector<2x1x32xf32>
    "tpu.trace_stop"() : () -> ()
    %43 = vector.shape_cast %42 : vector<2x1x32xf32> to vector<2x32xf32>
    %c0_30 = arith.constant 0 : index
    %c0_31 = arith.constant 0 : index
    %44 = vector.load %arg11[%c0_30, %c0_31] : memref<16x32xf32, #tpu.memory_space<vmem>>, vector<16x32xf32>
    %cst_32 = arith.constant dense<0.000000e+00> : vector<2x32xf32>
    %45 = tpu.matmul %12, %44, %cst_32 {dimension_numbers = #tpu.dot_dimension_numbers<[1], [0], [0], [1], [0, 0, 1, 1], [], []>} : vector<2x16xf32>, vector<16x32xf32>, vector<2x32xf32> -> vector<2x32xf32>
    %c0_33 = arith.constant 0 : index
    %c0_34 = arith.constant 0 : index
    %46 = vector.load %arg12[%c0_33, %c0_34] : memref<32x32xf32, #tpu.memory_space<vmem>>, vector<32x32xf32>
    %cst_35 = arith.constant dense<0.000000e+00> : vector<2x32xf32>
    %47 = tpu.matmul %43, %46, %cst_35 {dimension_numbers = #tpu.dot_dimension_numbers<[1], [0], [0], [1], [0, 0, 1, 1], [], []>} : vector<2x32xf32>, vector<32x32xf32>, vector<2x32xf32> -> vector<2x32xf32>
    %48 = arith.addf %45, %47 : vector<2x32xf32>
    %c0_36 = arith.constant 0 : index
    %c0_37 = arith.constant 0 : index
    %c0_38 = arith.constant 0 : index
    %49 = vector.load %arg15[%c0_36, %c0_37, %c0_38] : memref<2x1x32xf32, #tpu.memory_space<vmem>>, vector<1x1x32xf32>
    %50 = vector.shape_cast %49 : vector<1x1x32xf32> to vector<1x32xf32>
    %51 = vector.broadcast %50 : vector<1x32xf32> to vector<2x32xf32>
    %52 = arith.addf %48, %51 : vector<2x32xf32>
    %c0_39 = arith.constant 0 : index
    %c0_40 = arith.constant 0 : index
    %c0_41 = arith.constant 0 : index
    %53 = vector.load %arg20[%c0_39, %c0_40, %c0_41] : memref<2x2x32xf32, #tpu.memory_space<vmem>>, vector<1x2x32xf32>
    %54 = vector.shape_cast %53 : vector<1x2x32xf32> to vector<2x32xf32>
    %c0_42 = arith.constant 0 : index
    %c0_43 = arith.constant 0 : index
    %c0_44 = arith.constant 0 : index
    %55 = vector.load %arg14[%c0_42, %c0_43, %c0_44] : memref<2x32x32xf32, #tpu.memory_space<vmem>>, vector<1x32x32xf32>
    %56 = vector.shape_cast %55 : vector<1x32x32xf32> to vector<32x32xf32>
    %cst_45 = arith.constant dense<0.000000e+00> : vector<2x32xf32>
    %57 = tpu.matmul %54, %56, %cst_45 {dimension_numbers = #tpu.dot_dimension_numbers<[1], [0], [0], [1], [0, 0, 1, 1], [], []>} : vector<2x32xf32>, vector<32x32xf32>, vector<2x32xf32> -> vector<2x32xf32>
    %58 = arith.addf %52, %57 : vector<2x32xf32>
    %c0_46 = arith.constant 0 : index
    %c0_47 = arith.constant 0 : index
    %c0_48 = arith.constant 0 : index
    %59 = vector.load %arg16[%c0_46, %c0_47, %c0_48] : memref<2x1x32xf32, #tpu.memory_space<vmem>>, vector<1x1x32xf32>
    %60 = vector.shape_cast %59 : vector<1x1x32xf32> to vector<1x32xf32>
    %61 = vector.broadcast %60 : vector<1x32xf32> to vector<2x32xf32>
    %62 = arith.addf %58, %61 : vector<2x32xf32>
    %63 = math.tanh %62 : vector<2x32xf32>
    %c0_49 = arith.constant 0 : index
    %c0_50 = arith.constant 0 : index
    %c0_51 = arith.constant 0 : index
    %64 = vector.load %arg20[%c0_49, %c0_50, %c0_51] : memref<2x2x32xf32, #tpu.memory_space<vmem>>, vector<1x2x32xf32>
    %65 = vector.shape_cast %64 : vector<1x2x32xf32> to vector<2x32xf32>
    %66 = vector.shape_cast %63 : vector<2x32xf32> to vector<1x2x32xf32>
    tpu.vector_store %arg20[%c0_49, %c0_50, %c0_51], %66 {strides = array<i32>} : memref<2x2x32xf32, #tpu.memory_space<vmem>>, vector<1x2x32xf32>,
    %c0_52 = arith.constant 0 : index
    %c0_53 = arith.constant 0 : index
    %c0_54 = arith.constant 0 : index
    %67 = vector.load %arg13[%c0_52, %c0_53, %c0_54] : memref<1x32x32xf32, #tpu.memory_space<vmem>>, vector<1x32x32xf32>
    %68 = vector.shape_cast %67 : vector<1x32x32xf32> to vector<32x32xf32>
    %cst_55 = arith.constant dense<0.000000e+00> : vector<2x32xf32>
    %69 = tpu.matmul %63, %68, %cst_55 {dimension_numbers = #tpu.dot_dimension_numbers<[1], [0], [0], [1], [0, 0, 1, 1], [], []>} : vector<2x32xf32>, vector<32x32xf32>, vector<2x32xf32> -> vector<2x32xf32>
    %c1_56 = arith.constant 1 : index
    %c0_57 = arith.constant 0 : index
    %c0_58 = arith.constant 0 : index
    %70 = vector.load %arg15[%c1_56, %c0_57, %c0_58] : memref<2x1x32xf32, #tpu.memory_space<vmem>>, vector<1x1x32xf32>
    %71 = vector.shape_cast %70 : vector<1x1x32xf32> to vector<1x32xf32>
    %72 = vector.broadcast %71 : vector<1x32xf32> to vector<2x32xf32>
    %73 = arith.addf %69, %72 : vector<2x32xf32>
    %c1_59 = arith.constant 1 : index
    %c0_60 = arith.constant 0 : index
    %c0_61 = arith.constant 0 : index
    %74 = vector.load %arg20[%c1_59, %c0_60, %c0_61] : memref<2x2x32xf32, #tpu.memory_space<vmem>>, vector<1x2x32xf32>
    %75 = vector.shape_cast %74 : vector<1x2x32xf32> to vector<2x32xf32>
    %c1_62 = arith.constant 1 : index
    %c0_63 = arith.constant 0 : index
    %c0_64 = arith.constant 0 : index
    %76 = vector.load %arg14[%c1_62, %c0_63, %c0_64] : memref<2x32x32xf32, #tpu.memory_space<vmem>>, vector<1x32x32xf32>
    %77 = vector.shape_cast %76 : vector<1x32x32xf32> to vector<32x32xf32>
    %cst_65 = arith.constant dense<0.000000e+00> : vector<2x32xf32>
    %78 = tpu.matmul %75, %77, %cst_65 {dimension_numbers = #tpu.dot_dimension_numbers<[1], [0], [0], [1], [0, 0, 1, 1], [], []>} : vector<2x32xf32>, vector<32x32xf32>, vector<2x32xf32> -> vector<2x32xf32>
    %79 = arith.addf %73, %78 : vector<2x32xf32>
    %c1_66 = arith.constant 1 : index
    %c0_67 = arith.constant 0 : index
    %c0_68 = arith.constant 0 : index
    %80 = vector.load %arg16[%c1_66, %c0_67, %c0_68] : memref<2x1x32xf32, #tpu.memory_space<vmem>>, vector<1x1x32xf32>
    %81 = vector.shape_cast %80 : vector<1x1x32xf32> to vector<1x32xf32>
    %82 = vector.broadcast %81 : vector<1x32xf32> to vector<2x32xf32>
    %83 = arith.addf %79, %82 : vector<2x32xf32>
    %84 = math.tanh %83 : vector<2x32xf32>
    %c1_69 = arith.constant 1 : index
    %c0_70 = arith.constant 0 : index
    %c0_71 = arith.constant 0 : index
    %85 = vector.load %arg20[%c1_69, %c0_70, %c0_71] : memref<2x2x32xf32, #tpu.memory_space<vmem>>, vector<1x2x32xf32>
    %86 = vector.shape_cast %85 : vector<1x2x32xf32> to vector<2x32xf32>
    %87 = vector.shape_cast %84 : vector<2x32xf32> to vector<1x2x32xf32>
    tpu.vector_store %arg20[%c1_69, %c0_70, %c0_71], %87 {strides = array<i32>} : memref<2x2x32xf32, #tpu.memory_space<vmem>>, vector<1x2x32xf32>,
    %c0_72 = arith.constant 0 : index
    %c0_73 = arith.constant 0 : index
    %88 = vector.load %arg17[%c0_72, %c0_73] : memref<32x16xf32, #tpu.memory_space<vmem>>, vector<32x16xf32>
    %cst_74 = arith.constant dense<0.000000e+00> : vector<2x16xf32>
    %89 = tpu.matmul %84, %88, %cst_74 {dimension_numbers = #tpu.dot_dimension_numbers<[1], [0], [0], [1], [0, 0, 1, 1], [], []>} : vector<2x32xf32>, vector<32x16xf32>, vector<2x16xf32> -> vector<2x16xf32>
    %c0_75 = arith.constant 0 : index
    %c0_76 = arith.constant 0 : index
    %90 = vector.load %arg18[%c0_75, %c0_76] : memref<1x16xf32, #tpu.memory_space<vmem>>, vector<1x16xf32>
    %91 = vector.broadcast %90 : vector<1x16xf32> to vector<2x16xf32>
    %92 = arith.addf %89, %91 : vector<2x16xf32>
    %c0_77 = arith.constant 0 : index
    %c0_78 = arith.constant 0 : index
    %c0_79 = arith.constant 0 : index
    %93 = vector.load %arg19[%c0_77, %c0_78, %c0_79] : memref<1x2x16xf32, #tpu.memory_space<vmem>>, vector<1x2x16xf32>
    %94 = vector.shape_cast %93 : vector<1x2x16xf32> to vector<2x16xf32>
    %95 = vector.shape_cast %92 : vector<2x16xf32> to vector<1x2x16xf32>
    tpu.vector_store %arg19[%c0_77, %c0_78, %c0_79], %95 {strides = array<i32>} : memref<1x2x16xf32, #tpu.memory_space<vmem>>, vector<1x2x16xf32>,
    %cst_80 = arith.constant dense<0xFF800000> : vector<2xf32>
    %96 = vector.multi_reduction <maximumf>, %92, %cst_80 [1] : vector<2x16xf32> to vector<2xf32>
    %97 = vector.shape_cast %96 : vector<2xf32> to vector<2x1xf32>
    %98 = tpu.iota {dimensions = array<i32: 1>} : vector<2x16xi32>
    %99 = vector.broadcast %97 : vector<2x1xf32> to vector<2x16xf32>
    %100 = arith.cmpf oeq, %92, %99 : vector<2x16xf32>
    %c16_i32 = arith.constant 16 : i32
    %101 = vector.broadcast %c16_i32 : i32 to vector<2x16xi32>
    %102 = arith.select %100, %98, %101 : vector<2x16xi1>, vector<2x16xi32>
    %cst_81 = arith.constant dense<2147483647> : vector<2xi32>
    %103 = vector.multi_reduction <minsi>, %102, %cst_81 [1] : vector<2x16xi32> to vector<2xi32>
    %104 = vector.shape_cast %103 : vector<2xi32> to vector<2x1xi32>
    %105 = arith.index_cast %arg0 : i32 to index
    %106 = memref.load %arg1[%105] : memref<8xi32, #tpu.memory_space<smem>>
    %c0_i32_82 = arith.constant 0 : i32
    %107 = arith.cmpi sgt, %106, %c0_i32_82 : i32
    %108 = arith.extui %107 : i1 to i32
    %c0_i32_83 = arith.constant 0 : i32
    %109 = arith.cmpi ne, %108, %c0_i32_83 : i32
    scf.if %109 {
      %c0_86 = arith.constant 0 : index
      %c0_87 = arith.constant 0 : index
      %113 = vector.load %arg21[%c0_86, %c0_87] : memref<2x1xi32, #tpu.memory_space<vmem>>, vector<2x1xi32>
      tpu.vector_store %arg21[%c0_86, %c0_87], %1 {strides = array<i32>} : memref<2x1xi32, #tpu.memory_space<vmem>>, vector<2x1xi32>,
    } else {
    }
    %c0_i32_84 = arith.constant 0 : i32
    %110 = arith.cmpi eq, %106, %c0_i32_84 : i32
    %111 = arith.extui %110 : i1 to i32
    %c0_i32_85 = arith.constant 0 : i32
    %112 = arith.cmpi ne, %111, %c0_i32_85 : i32
    scf.if %112 {
      %c0_86 = arith.constant 0 : index
      %c0_87 = arith.constant 0 : index
      %113 = vector.load %arg21[%c0_86, %c0_87] : memref<2x1xi32, #tpu.memory_space<vmem>>, vector<2x1xi32>
      tpu.vector_store %arg21[%c0_86, %c0_87], %104 {strides = array<i32>} : memref<2x1xi32, #tpu.memory_space<vmem>>, vector<2x1xi32>,
    } else {
    }
    return
  }
  func.func @transform_0(%arg0: i32, %arg1: memref<8xi32, #tpu.memory_space<smem>>) -> (i32, i32, i32) {
    %c0_i32 = arith.constant 0 : i32
    %c0_i32_0 = arith.constant 0 : i32
    %c0_i32_1 = arith.constant 0 : i32
    return %arg0, %c0_i32, %c0_i32_0 : i32, i32, i32
  }
  func.func @transform_1(%arg0: i32, %arg1: memref<8xi32, #tpu.memory_space<smem>>) -> (i32, i32, i32) {
    %c0_i32 = arith.constant 0 : i32
    %c0_i32_0 = arith.constant 0 : i32
    %c0_i32_1 = arith.constant 0 : i32
    %c0_i32_2 = arith.constant 0 : i32
    return %c0_i32, %c0_i32_0, %c0_i32_1 : i32, i32, i32
  }
  func.func @transform_2(%arg0: i32, %arg1: memref<8xi32, #tpu.memory_space<smem>>) -> (i32, i32, i32) {
    %c0_i32 = arith.constant 0 : i32
    %c0_i32_0 = arith.constant 0 : i32
    %c0_i32_1 = arith.constant 0 : i32
    %c0_i32_2 = arith.constant 0 : i32
    return %c0_i32, %c0_i32_0, %c0_i32_1 : i32, i32, i32
  }
  func.func @transform_3(%arg0: i32, %arg1: memref<8xi32, #tpu.memory_space<smem>>) -> (i32, i32, i32) {
    %c0_i32 = arith.constant 0 : i32
    %c0_i32_0 = arith.constant 0 : i32
    %c0_i32_1 = arith.constant 0 : i32
    %c0_i32_2 = arith.constant 0 : i32
    return %c0_i32, %c0_i32_0, %c0_i32_1 : i32, i32, i32
  }
  func.func @transform_4(%arg0: i32, %arg1: memref<8xi32, #tpu.memory_space<smem>>) -> (i32, i32) {
    %c0_i32 = arith.constant 0 : i32
    %c0_i32_0 = arith.constant 0 : i32
    %c0_i32_1 = arith.constant 0 : i32
    return %c0_i32, %c0_i32_0 : i32, i32
  }
  func.func @transform_5(%arg0: i32, %arg1: memref<8xi32, #tpu.memory_space<smem>>) -> (i32, i32) {
    %c0_i32 = arith.constant 0 : i32
    %c0_i32_0 = arith.constant 0 : i32
    %c0_i32_1 = arith.constant 0 : i32
    return %c0_i32, %c0_i32_0 : i32, i32
  }
  func.func @transform_6(%arg0: i32, %arg1: memref<8xi32, #tpu.memory_space<smem>>) -> (i32, i32) {
    %c0_i32 = arith.constant 0 : i32
    %c0_i32_0 = arith.constant 0 : i32
    %c0_i32_1 = arith.constant 0 : i32
    return %c0_i32, %c0_i32_0 : i32, i32
  }
  func.func @transform_7(%arg0: i32, %arg1: memref<8xi32, #tpu.memory_space<smem>>) -> (i32, i32, i32) {
    %c0_i32 = arith.constant 0 : i32
    %c0_i32_0 = arith.constant 0 : i32
    %c0_i32_1 = arith.constant 0 : i32
    %c0_i32_2 = arith.constant 0 : i32
    return %c0_i32, %c0_i32_0, %c0_i32_1 : i32, i32, i32
  }
  func.func @transform_8(%arg0: i32, %arg1: memref<8xi32, #tpu.memory_space<smem>>) -> (i32, i32, i32) {
    %c0_i32 = arith.constant 0 : i32
    %c0_i32_0 = arith.constant 0 : i32
    %c0_i32_1 = arith.constant 0 : i32
    %c0_i32_2 = arith.constant 0 : i32
    return %c0_i32, %c0_i32_0, %c0_i32_1 : i32, i32, i32
  }
  func.func @transform_9(%arg0: i32, %arg1: memref<8xi32, #tpu.memory_space<smem>>) -> (i32, i32) {
    %c0_i32 = arith.constant 0 : i32
    %c0_i32_0 = arith.constant 0 : i32
    %c0_i32_1 = arith.constant 0 : i32
    return %c0_i32, %c0_i32_0 : i32, i32
  }
  func.func @transform_10(%arg0: i32, %arg1: memref<8xi32, #tpu.memory_space<smem>>) -> (i32, i32) {
    %c0_i32 = arith.constant 0 : i32
    %c0_i32_0 = arith.constant 0 : i32
    %c0_i32_1 = arith.constant 0 : i32
    return %c0_i32, %c0_i32_0 : i32, i32
  }
  func.func @transform_11(%arg0: i32, %arg1: memref<8xi32, #tpu.memory_space<smem>>) -> (i32, i32, i32) {
    %c0_i32 = arith.constant 0 : i32
    %c0_i32_0 = arith.constant 0 : i32
    %c0_i32_1 = arith.constant 0 : i32
    %c0_i32_2 = arith.constant 0 : i32
    return %c0_i32, %c0_i32_0, %c0_i32_1 : i32, i32, i32
  }
  func.func @transform_12(%arg0: i32, %arg1: memref<8xi32, #tpu.memory_space<smem>>) -> (i32, i32, i32) {
    %c0_i32 = arith.constant 0 : i32
    %c0_i32_0 = arith.constant 0 : i32
    %c0_i32_1 = arith.constant 0 : i32
    %c0_i32_2 = arith.constant 0 : i32
    return %c0_i32, %c0_i32_0, %c0_i32_1 : i32, i32, i32
  }
  func.func @transform_13(%arg0: i32, %arg1: memref<8xi32, #tpu.memory_space<smem>>) -> (i32, i32, i32) {
    %c0_i32 = arith.constant 0 : i32
    %c0_i32_0 = arith.constant 0 : i32
    %c0_i32_1 = arith.constant 0 : i32
    %c0_i32_2 = arith.constant 0 : i32
    return %c0_i32, %c0_i32_0, %c0_i32_1 : i32, i32, i32
  }
  func.func @transform_14(%arg0: i32, %arg1: memref<8xi32, #tpu.memory_space<smem>>) -> (i32, i32, i32) {
    %c0_i32 = arith.constant 0 : i32
    %c0_i32_0 = arith.constant 0 : i32
    %c0_i32_1 = arith.constant 0 : i32
    %c0_i32_2 = arith.constant 0 : i32
    return %c0_i32, %c0_i32_0, %c0_i32_1 : i32, i32, i32
  }
  func.func @transform_15(%arg0: i32, %arg1: memref<8xi32, #tpu.memory_space<smem>>) -> (i32, i32) {
    %c0_i32 = arith.constant 0 : i32
    %c0_i32_0 = arith.constant 0 : i32
    %c0_i32_1 = arith.constant 0 : i32
    return %c0_i32, %c0_i32_0 : i32, i32
  }
  func.func @transform_16(%arg0: i32, %arg1: memref<8xi32, #tpu.memory_space<smem>>) -> (i32, i32) {
    %c0_i32 = arith.constant 0 : i32
    %c0_i32_0 = arith.constant 0 : i32
    %c0_i32_1 = arith.constant 0 : i32
    return %c0_i32, %c0_i32_0 : i32, i32
  }
  func.func @transform_17(%arg0: i32, %arg1: memref<8xi32, #tpu.memory_space<smem>>) -> (i32, i32, i32) {
    %c0_i32 = arith.constant 0 : i32
    %c0_i32_0 = arith.constant 0 : i32
    %c0_i32_1 = arith.constant 0 : i32
    return %arg0, %c0_i32, %c0_i32_0 : i32, i32, i32
  }
}

</mosaic_0001>

<llo_original>
// kernel: attention_decoder_forward.1
$region0: #{attention_decoder_forward.1}
  #allocation0 [shape = 'u32[]', space=smem, size = 0x4, offset = 0x4, fixed_abs, tag = 'smem constant byte address 0x4 - core index']
  #allocation1 [shape = 'u32[72,128]{1,0:T(1,128)}', space=vmem, size = 0x9000, scoped, tag = 'internal scratch']
  #allocation2 [shape = 'f32[2,2,32]{2,1,0:T(2,128)}', space=vmem, size = 0x800, scoped, tag = 'scratch operand']
  #allocation3 [shape = 's32[2,1]{1,0:T(2,128)}', space=vmem, size = 0x400, scoped, tag = 'scratch operand']
  #allocation4 [shape = 's32[1]{0}', space=sflag, size = 0x4, scoped, tag = 'scoped memory for attention_decoder_forward.1']
  #allocation5 [shape = 'u8[512]{0}', space=smem, size = 0x200, scoped, tag = 'prefetched SMEM operand 0']
  #allocation6 [shape = 'f32[1,1,1]{2,1,0:T(1,128)S(1)}', space=vmem, size = 0x200, scoped, tag = 'scoped memory for attention_decoder_forward.1']
  %s0 = inlined_call_operand.vmem [shape: s32[8], index: 0, kind: input, shape index: {}]
  %s1 = inlined_call_operand.vmem [shape: s32[8,2,1], index: 1, kind: input, shape index: {}]
  %s2 = inlined_call_operand.vmem [shape: f32[2,8,32], index: 2, kind: input, shape index: {}]
  %s3 = inlined_call_operand.vmem [shape: f32[2,8,32], index: 3, kind: input, shape index: {}]
  %s4 = inlined_call_operand.vmem [shape: f32[2,2,32], index: 4, kind: input, shape index: {}]
  %s5 = inlined_call_operand.vmem [shape: f32[16,16], index: 5, kind: input, shape index: {}]
  %s6 = inlined_call_operand.vmem [shape: f32[32,32], index: 6, kind: input, shape index: {}]
  %s7 = inlined_call_operand.vmem [shape: f32[1,32], index: 7, kind: input, shape index: {}]
  %s8 = inlined_call_operand.vmem [shape: f32[1,1,32], index: 8, kind: input, shape index: {}]
  %s9 = inlined_call_operand.<no memory space> [shape: f32[1,1,1], index: 9, kind: input, shape index: {}]
  %s10 = inlined_call_operand.vmem [shape: f32[16,32], index: 10, kind: input, shape index: {}]
  %s11 = inlined_call_operand.vmem [shape: f32[32,32], index: 11, kind: input, shape index: {}]
  %s12 = inlined_call_operand.vmem [shape: f32[1,32,32], index: 12, kind: input, shape index: {}]
  %s13 = inlined_call_operand.vmem [shape: f32[2,32,32], index: 13, kind: input, shape index: {}]
  %s14 = inlined_call_operand.vmem [shape: f32[2,1,32], index: 14, kind: input, shape index: {}]
  %s15 = inlined_call_operand.vmem [shape: f32[2,1,32], index: 15, kind: input, shape index: {}]
  %s16 = inlined_call_operand.vmem [shape: f32[32,16], index: 16, kind: input, shape index: {}]
  %s17 = inlined_call_operand.vmem [shape: f32[1,16], index: 17, kind: input, shape index: {}]
  %s18 = inlined_call_operand.hbm [shape: f32[8,2,16], index: 18, kind: output, shape index: {}]
  %s19 = sld [smem:[#allocation0]]
  $region113: #{attention_decoder_forward.1} parent=0
    _
  %s21 = ssub.s32 1, %s19
  %s22 = scalar_select 0, %s21, %s19
  %s24 = sshll.u32 %s0, 4
  %s25 = int_to_ptr.vmem [resolvable:$true] %s24
  %27 = dma.vmem_to_smem %s25, 16, [#allocation5], [#allocation4]
  %v28 = vstv %s9
  %29 = vst [vmem:[#allocation6] sm:$0x1] %v28
  %31 = dma.done [#allocation4], 16
  %32 = sfence
  $region1: #{attention_decoder_forward.1} parent=0
    #allocation7 [shape = 'u8[2048]{0}', space=vmem, size = 0x800, scoped, tag = 'output window, operand 0']
    #allocation8 [shape = 's32[2]{0}', space=sflag, size = 0x8, scoped, tag = 'scoped memory for attention_decoder_forward.1']
    %33 = vsyncpa [#allocation8], 0
    %s34 = scalar_lea.sflag [#allocation8], 1
    %35 = vsyncpa %s34, 0
    loop: start=0, step=1, limit=10
    $region2: #{attention_decoder_forward.1} parent=1 // loop_pre_header
      _
    $region3: #{attention_decoder_forward.1} parent=1 // loop_header
      %s37 = sphi 0, %s41
      %p38 = scmp.ge.s32.totalorder %s37, 10
      %s47 = sphi 0, %s49
      %s50 = sphi 0, %s47
      %s51 = sphi 0, %s50
      %s67 = sphi 0, %s51
      %s71 = sphi 0, %s71
      %s73 = sphi 0, %s71
      %s74 = sphi 0, %s73
      %s88 = sphi 0, %s74
      %s92 = sphi 0, %s92
      %s94 = sphi 0, %s92
      %s95 = sphi 0, %s94
      %s109 = sphi 0, %s95
      %s113 = sphi 0, %s113
      %s115 = sphi 0, %s113
      %s116 = sphi 0, %s115
      %s130 = sphi 0, %s116
      %s134 = sphi 0, %s134
      %s136 = sphi 0, %s134
      %s137 = sphi 0, %s136
      %s151 = sphi 0, %s137
      %s155 = sphi 0, %s155
      %s157 = sphi 0, %s155
      %s158 = sphi 0, %s157
      %s172 = sphi 0, %s158
      %s176 = sphi 0, %s176
      %s178 = sphi 0, %s176
      %s179 = sphi 0, %s178
      %s193 = sphi 0, %s179
      %s197 = sphi 0, %s197
      %s199 = sphi 0, %s197
      %s200 = sphi 0, %s199
      %s214 = sphi 0, %s200
      %s218 = sphi 0, %s218
      %s220 = sphi 0, %s218
      %s221 = sphi 0, %s220
      %s235 = sphi 0, %s221
      %s239 = sphi 0, %s239
      %s241 = sphi 0, %s239
      %s242 = sphi 0, %s241
      %s256 = sphi 0, %s242
      %s260 = sphi 0, %s260
      %s262 = sphi 0, %s260
      %s263 = sphi 0, %s262
      %s277 = sphi 0, %s263
      %s281 = sphi 0, %s281
      %s283 = sphi 0, %s281
      %s284 = sphi 0, %s283
      %s298 = sphi 0, %s284
      %s302 = sphi 0, %s302
      %s304 = sphi 0, %s302
      %s305 = sphi 0, %s304
      %s319 = sphi 0, %s305
      %s323 = sphi 0, %s323
      %s325 = sphi 0, %s323
      %s326 = sphi 0, %s325
      %s340 = sphi 0, %s326
      %s344 = sphi 0, %s344
      %s346 = sphi 0, %s344
      %s347 = sphi 0, %s346
      %s361 = sphi 0, %s347
      %s365 = sphi 0, %s365
      %s367 = sphi 0, %s365
      %s368 = sphi 0, %s367
      %s382 = sphi 0, %s368
      %s386 = sphi 0, %s386
      %s388 = sphi 0, %s386
      %s389 = sphi 0, %s388
      %s403 = sphi 0, %s389
      %s409 = sphi 0, %s411
      %s412 = sphi 0, %s409
      %s413 = sphi 0, %s412
      %s429 = sphi 0, %s413
    $region4: #{attention_decoder_forward.1} parent=1 // loop_header_branch
      %40 = sbr.rel (%p38) target = $region8
    $region5: #{attention_decoder_forward.1} parent=1 // loop_body
      %s42 = ssub.s32 %s37, 1
      %s43 = ssub.s32 %s37, 2
      %s44 = sadd.s32 %s37, 1
      %s45 = ssub.s32 %s37, %s44
      %p46 = scmp.eq.s32.totalorder %s45, 0
      %s48 = sadd.s32 %s47, 1
      %s49 = scalar_select %p46, %s47, %s48
      %p52 = pneg %p46
      %p53 = scmp.eq.s32.totalorder %s37, 7
      %p54 = por %p52, %p53
      %p55 = scmp.ne.s32.totalorder %s47, %s50
      %p56 = scmp.eq.s32.totalorder %s37, 0
      %p57 = por %p55, %p56
      %p58 = scmp.ne.s32.totalorder %s47, %s50
      %p59 = scmp.eq.s32.totalorder %s42, 7
      %p60 = por %p58, %p59
      %p61 = scmp.ne.s32.totalorder %s50, %s51
      %p62 = scmp.eq.s32.totalorder %s42, 0
      %p63 = por %p61, %p62
      %p64 = scmp.ne.s32.totalorder %s50, %s51
      %p65 = scmp.eq.s32.totalorder %s43, 7
      %p66 = por %p64, %p65
      %p68 = scmp.ne.s32.totalorder %s51, %s67
      %p69 = scmp.eq.s32.totalorder %s43, 0
      %p70 = por %p68, %p69
      %s72 = sadd.s32 %s71, 1
      %p75 = scmp.eq.s32.totalorder %s37, 7
      %p76 = scmp.ne.s32.totalorder %s71, %s73
      %p77 = scmp.eq.s32.totalorder %s37, 0
      %p78 = por %p76, %p77
      %p79 = scmp.ne.s32.totalorder %s71, %s73
      %p80 = scmp.eq.s32.totalorder %s42, 7
      %p81 = por %p79, %p80
      %p82 = scmp.ne.s32.totalorder %s73, %s74
      %p83 = scmp.eq.s32.totalorder %s42, 0
      %p84 = por %p82, %p83
      %p85 = scmp.ne.s32.totalorder %s73, %s74
      %p86 = scmp.eq.s32.totalorder %s43, 7
      %p87 = por %p85, %p86
      %p89 = scmp.ne.s32.totalorder %s74, %s88
      %p90 = scmp.eq.s32.totalorder %s43, 0
      %p91 = por %p89, %p90
      %s93 = sadd.s32 %s92, 1
      %p96 = scmp.eq.s32.totalorder %s37, 7
      %p97 = scmp.ne.s32.totalorder %s92, %s94
      %p98 = scmp.eq.s32.totalorder %s37, 0
      %p99 = por %p97, %p98
      %p100 = scmp.ne.s32.totalorder %s92, %s94
      %p101 = scmp.eq.s32.totalorder %s42, 7
      %p102 = por %p100, %p101
      %p103 = scmp.ne.s32.totalorder %s94, %s95
      %p104 = scmp.eq.s32.totalorder %s42, 0
      %p105 = por %p103, %p104
      %p106 = scmp.ne.s32.totalorder %s94, %s95
      %p107 = scmp.eq.s32.totalorder %s43, 7
      %p108 = por %p106, %p107
      %p110 = scmp.ne.s32.totalorder %s95, %s109
      %p111 = scmp.eq.s32.totalorder %s43, 0
      %p112 = por %p110, %p111
      %s114 = sadd.s32 %s113, 1
      %p117 = scmp.eq.s32.totalorder %s37, 7
      %p118 = scmp.ne.s32.totalorder %s113, %s115
      %p119 = scmp.eq.s32.totalorder %s37, 0
      %p120 = por %p118, %p119
      %p121 = scmp.ne.s32.totalorder %s113, %s115
      %p122 = scmp.eq.s32.totalorder %s42, 7
      %p123 = por %p121, %p122
      %p124 = scmp.ne.s32.totalorder %s115, %s116
      %p125 = scmp.eq.s32.totalorder %s42, 0
      %p126 = por %p124, %p125
      %p127 = scmp.ne.s32.totalorder %s115, %s116
      %p128 = scmp.eq.s32.totalorder %s43, 7
      %p129 = por %p127, %p128
      %p131 = scmp.ne.s32.totalorder %s116, %s130
      %p132 = scmp.eq.s32.totalorder %s43, 0
      %p133 = por %p131, %p132
      %s135 = sadd.s32 %s134, 1
      %p138 = scmp.eq.s32.totalorder %s37, 7
      %p139 = scmp.ne.s32.totalorder %s134, %s136
      %p140 = scmp.eq.s32.totalorder %s37, 0
      %p141 = por %p139, %p140
      %p142 = scmp.ne.s32.totalorder %s134, %s136
      %p143 = scmp.eq.s32.totalorder %s42, 7
      %p144 = por %p142, %p143
      %p145 = scmp.ne.s32.totalorder %s136, %s137
      %p146 = scmp.eq.s32.totalorder %s42, 0
      %p147 = por %p145, %p146
      %p148 = scmp.ne.s32.totalorder %s136, %s137
      %p149 = scmp.eq.s32.totalorder %s43, 7
      %p150 = por %p148, %p149
      %p152 = scmp.ne.s32.totalorder %s137, %s151
      %p153 = scmp.eq.s32.totalorder %s43, 0
      %p154 = por %p152, %p153
      %s156 = sadd.s32 %s155, 1
      %p159 = scmp.eq.s32.totalorder %s37, 7
      %p160 = scmp.ne.s32.totalorder %s155, %s157
      %p161 = scmp.eq.s32.totalorder %s37, 0
      %p162 = por %p160, %p161
      %p163 = scmp.ne.s32.totalorder %s155, %s157
      %p164 = scmp.eq.s32.totalorder %s42, 7
      %p165 = por %p163, %p164
      %p166 = scmp.ne.s32.totalorder %s157, %s158
      %p167 = scmp.eq.s32.totalorder %s42, 0
      %p168 = por %p166, %p167
      %p169 = scmp.ne.s32.totalorder %s157, %s158
      %p170 = scmp.eq.s32.totalorder %s43, 7
      %p171 = por %p169, %p170
      %p173 = scmp.ne.s32.totalorder %s158, %s172
      %p174 = scmp.eq.s32.totalorder %s43, 0
      %p175 = por %p173, %p174
      %s177 = sadd.s32 %s176, 1
      %p180 = scmp.eq.s32.totalorder %s37, 7
      %p181 = scmp.ne.s32.totalorder %s176, %s178
      %p182 = scmp.eq.s32.totalorder %s37, 0
      %p183 = por %p181, %p182
      %p184 = scmp.ne.s32.totalorder %s176, %s178
      %p185 = scmp.eq.s32.totalorder %s42, 7
      %p186 = por %p184, %p185
      %p187 = scmp.ne.s32.totalorder %s178, %s179
      %p188 = scmp.eq.s32.totalorder %s42, 0
      %p189 = por %p187, %p188
      %p190 = scmp.ne.s32.totalorder %s178, %s179
      %p191 = scmp.eq.s32.totalorder %s43, 7
      %p192 = por %p190, %p191
      %p194 = scmp.ne.s32.totalorder %s179, %s193
      %p195 = scmp.eq.s32.totalorder %s43, 0
      %p196 = por %p194, %p195
      %s198 = sadd.s32 %s197, 1
      %p201 = scmp.eq.s32.totalorder %s37, 7
      %p202 = scmp.ne.s32.totalorder %s197, %s199
      %p203 = scmp.eq.s32.totalorder %s37, 0
      %p204 = por %p202, %p203
      %p205 = scmp.ne.s32.totalorder %s197, %s199
      %p206 = scmp.eq.s32.totalorder %s42, 7
      %p207 = por %p205, %p206
      %p208 = scmp.ne.s32.totalorder %s199, %s200
      %p209 = scmp.eq.s32.totalorder %s42, 0
      %p210 = por %p208, %p209
      %p211 = scmp.ne.s32.totalorder %s199, %s200
      %p212 = scmp.eq.s32.totalorder %s43, 7
      %p213 = por %p211, %p212
      %p215 = scmp.ne.s32.totalorder %s200, %s214
      %p216 = scmp.eq.s32.totalorder %s43, 0
      %p217 = por %p215, %p216
      %s219 = sadd.s32 %s218, 1
      %p222 = scmp.eq.s32.totalorder %s37, 7
      %p223 = scmp.ne.s32.totalorder %s218, %s220
      %p224 = scmp.eq.s32.totalorder %s37, 0
      %p225 = por %p223, %p224
      %p226 = scmp.ne.s32.totalorder %s218, %s220
      %p227 = scmp.eq.s32.totalorder %s42, 7
      %p228 = por %p226, %p227
      %p229 = scmp.ne.s32.totalorder %s220, %s221
      %p230 = scmp.eq.s32.totalorder %s42, 0
      %p231 = por %p229, %p230
      %p232 = scmp.ne.s32.totalorder %s220, %s221
      %p233 = scmp.eq.s32.totalorder %s43, 7
      %p234 = por %p232, %p233
      %p236 = scmp.ne.s32.totalorder %s221, %s235
      %p237 = scmp.eq.s32.totalorder %s43, 0
      %p238 = por %p236, %p237
      %s240 = sadd.s32 %s239, 1
      %p243 = scmp.eq.s32.totalorder %s37, 7
      %p244 = scmp.ne.s32.totalorder %s239, %s241
      %p245 = scmp.eq.s32.totalorder %s37, 0
      %p246 = por %p244, %p245
      %p247 = scmp.ne.s32.totalorder %s239, %s241
      %p248 = scmp.eq.s32.totalorder %s42, 7
      %p249 = por %p247, %p248
      %p250 = scmp.ne.s32.totalorder %s241, %s242
      %p251 = scmp.eq.s32.totalorder %s42, 0
      %p252 = por %p250, %p251
      %p253 = scmp.ne.s32.totalorder %s241, %s242
      %p254 = scmp.eq.s32.totalorder %s43, 7
      %p255 = por %p253, %p254
      %p257 = scmp.ne.s32.totalorder %s242, %s256
      %p258 = scmp.eq.s32.totalorder %s43, 0
      %p259 = por %p257, %p258
      %s261 = sadd.s32 %s260, 1
      %p264 = scmp.eq.s32.totalorder %s37, 7
      %p265 = scmp.ne.s32.totalorder %s260, %s262
      %p266 = scmp.eq.s32.totalorder %s37, 0
      %p267 = por %p265, %p266
      %p268 = scmp.ne.s32.totalorder %s260, %s262
      %p269 = scmp.eq.s32.totalorder %s42, 7
      %p270 = por %p268, %p269
      %p271 = scmp.ne.s32.totalorder %s262, %s263
      %p272 = scmp.eq.s32.totalorder %s42, 0
      %p273 = por %p271, %p272
      %p274 = scmp.ne.s32.totalorder %s262, %s263
      %p275 = scmp.eq.s32.totalorder %s43, 7
      %p276 = por %p274, %p275
      %p278 = scmp.ne.s32.totalorder %s263, %s277
      %p279 = scmp.eq.s32.totalorder %s43, 0
      %p280 = por %p278, %p279
      %s282 = sadd.s32 %s281, 1
      %p285 = scmp.eq.s32.totalorder %s37, 7
      %p286 = scmp.ne.s32.totalorder %s281, %s283
      %p287 = scmp.eq.s32.totalorder %s37, 0
      %p288 = por %p286, %p287
      %p289 = scmp.ne.s32.totalorder %s281, %s283
      %p290 = scmp.eq.s32.totalorder %s42, 7
      %p291 = por %p289, %p290
      %p292 = scmp.ne.s32.totalorder %s283, %s284
      %p293 = scmp.eq.s32.totalorder %s42, 0
      %p294 = por %p292, %p293
      %p295 = scmp.ne.s32.totalorder %s283, %s284
      %p296 = scmp.eq.s32.totalorder %s43, 7
      %p297 = por %p295, %p296
      %p299 = scmp.ne.s32.totalorder %s284, %s298
      %p300 = scmp.eq.s32.totalorder %s43, 0
      %p301 = por %p299, %p300
      %s303 = sadd.s32 %s302, 1
      %p306 = scmp.eq.s32.totalorder %s37, 7
      %p307 = scmp.ne.s32.totalorder %s302, %s304
      %p308 = scmp.eq.s32.totalorder %s37, 0
      %p309 = por %p307, %p308
      %p310 = scmp.ne.s32.totalorder %s302, %s304
      %p311 = scmp.eq.s32.totalorder %s42, 7
      %p312 = por %p310, %p311
      %p313 = scmp.ne.s32.totalorder %s304, %s305
      %p314 = scmp.eq.s32.totalorder %s42, 0
      %p315 = por %p313, %p314
      %p316 = scmp.ne.s32.totalorder %s304, %s305
      %p317 = scmp.eq.s32.totalorder %s43, 7
      %p318 = por %p316, %p317
      %p320 = scmp.ne.s32.totalorder %s305, %s319
      %p321 = scmp.eq.s32.totalorder %s43, 0
      %p322 = por %p320, %p321
      %s324 = sadd.s32 %s323, 1
      %p327 = scmp.eq.s32.totalorder %s37, 7
      %p328 = scmp.ne.s32.totalorder %s323, %s325
      %p329 = scmp.eq.s32.totalorder %s37, 0
      %p330 = por %p328, %p329
      %p331 = scmp.ne.s32.totalorder %s323, %s325
      %p332 = scmp.eq.s32.totalorder %s42, 7
      %p333 = por %p331, %p332
      %p334 = scmp.ne.s32.totalorder %s325, %s326
      %p335 = scmp.eq.s32.totalorder %s42, 0
      %p336 = por %p334, %p335
      %p337 = scmp.ne.s32.totalorder %s325, %s326
      %p338 = scmp.eq.s32.totalorder %s43, 7
      %p339 = por %p337, %p338
      %p341 = scmp.ne.s32.totalorder %s326, %s340
      %p342 = scmp.eq.s32.totalorder %s43, 0
      %p343 = por %p341, %p342
      %s345 = sadd.s32 %s344, 1
      %p348 = scmp.eq.s32.totalorder %s37, 7
      %p349 = scmp.ne.s32.totalorder %s344, %s346
      %p350 = scmp.eq.s32.totalorder %s37, 0
      %p351 = por %p349, %p350
      %p352 = scmp.ne.s32.totalorder %s344, %s346
      %p353 = scmp.eq.s32.totalorder %s42, 7
      %p354 = por %p352, %p353
      %p355 = scmp.ne.s32.totalorder %s346, %s347
      %p356 = scmp.eq.s32.totalorder %s42, 0
      %p357 = por %p355, %p356
      %p358 = scmp.ne.s32.totalorder %s346, %s347
      %p359 = scmp.eq.s32.totalorder %s43, 7
      %p360 = por %p358, %p359
      %p362 = scmp.ne.s32.totalorder %s347, %s361
      %p363 = scmp.eq.s32.totalorder %s43, 0
      %p364 = por %p362, %p363
      %s366 = sadd.s32 %s365, 1
      %p369 = scmp.eq.s32.totalorder %s37, 7
      %p370 = scmp.ne.s32.totalorder %s365, %s367
      %p371 = scmp.eq.s32.totalorder %s37, 0
      %p372 = por %p370, %p371
      %p373 = scmp.ne.s32.totalorder %s365, %s367
      %p374 = scmp.eq.s32.totalorder %s42, 7
      %p375 = por %p373, %p374
      %p376 = scmp.ne.s32.totalorder %s367, %s368
      %p377 = scmp.eq.s32.totalorder %s42, 0
      %p378 = por %p376, %p377
      %p379 = scmp.ne.s32.totalorder %s367, %s368
      %p380 = scmp.eq.s32.totalorder %s43, 7
      %p381 = por %p379, %p380
      %p383 = scmp.ne.s32.totalorder %s368, %s382
      %p384 = scmp.eq.s32.totalorder %s43, 0
      %p385 = por %p383, %p384
      %s387 = sadd.s32 %s386, 1
      %p390 = scmp.eq.s32.totalorder %s37, 7
      %p391 = scmp.ne.s32.totalorder %s386, %s388
      %p392 = scmp.eq.s32.totalorder %s37, 0
      %p393 = por %p391, %p392
      %p394 = scmp.ne.s32.totalorder %s386, %s388
      %p395 = scmp.eq.s32.totalorder %s42, 7
      %p396 = por %p394, %p395
      %p397 = scmp.ne.s32.totalorder %s388, %s389
      %p398 = scmp.eq.s32.totalorder %s42, 0
      %p399 = por %p397, %p398
      %p400 = scmp.ne.s32.totalorder %s388, %s389
      %p401 = scmp.eq.s32.totalorder %s43, 7
      %p402 = por %p400, %p401
      %p404 = scmp.ne.s32.totalorder %s389, %s403
      %p405 = scmp.eq.s32.totalorder %s43, 0
      %p406 = por %p404, %p405
      %s407 = ssub.s32 %s37, %s44
      %p408 = scmp.eq.s32.totalorder %s407, 0
      %s410 = sadd.s32 %s409, 1
      %s411 = scalar_select %p408, %s409, %s410
      %p414 = pneg %p408
      %p415 = scmp.eq.s32.totalorder %s37, 7
      %p416 = por %p414, %p415
      %p417 = scmp.ne.s32.totalorder %s409, %s412
      %p418 = scmp.eq.s32.totalorder %s37, 0
      %p419 = por %p417, %p418
      %p420 = scmp.ne.s32.totalorder %s409, %s412
      %p421 = scmp.eq.s32.totalorder %s42, 7
      %p422 = por %p420, %p421
      %p423 = scmp.ne.s32.totalorder %s412, %s413
      %p424 = scmp.eq.s32.totalorder %s42, 0
      %p425 = por %p423, %p424
      %p426 = scmp.ne.s32.totalorder %s412, %s413
      %p427 = scmp.eq.s32.totalorder %s43, 7
      %p428 = por %p426, %p427
      %p430 = scmp.ne.s32.totalorder %s413, %s429
      %p431 = scmp.eq.s32.totalorder %s43, 0
      %p432 = por %p430, %p431
      %p433 = scmp.le.s32.totalorder 1, %s37
      %p434 = scmp.lt.s32.totalorder %s37, 9
      %p435 = pnand %p433, %p434
      %p436 = pneg %p435
      // Predicated region
      $region9: #{attention_decoder_forward.1} parent=5 // pred_check
        _
      $region10: #{attention_decoder_forward.1} parent=5 // pred_check_branch
        %438 = sbr.rel (%p435) target = $region12
      $region11: #{attention_decoder_forward.1} parent=5 // pred_region
        %s439 = ssub.s32 %s37, 1
        // Predicated region
        $region13: #{attention_decoder_forward.1} parent=11 // pred_check
          %p440 = pneg %p84
        $region14: #{attention_decoder_forward.1} parent=11 // pred_check_branch
          %442 = sbr.rel (%p440) target = $region16
        $region15: #{attention_decoder_forward.1} parent=11 // pred_region
          _
        $region16: #{attention_decoder_forward.1} parent=11 // pred_fallthru
          _
        // Predicated region
        $region17: #{attention_decoder_forward.1} parent=11 // pred_check
          %p443 = pneg %p105
        $region18: #{attention_decoder_forward.1} parent=11 // pred_check_branch
          %445 = sbr.rel (%p443) target = $region20
        $region19: #{attention_decoder_forward.1} parent=11 // pred_region
          _
        $region20: #{attention_decoder_forward.1} parent=11 // pred_fallthru
          _
        // Predicated region
        $region21: #{attention_decoder_forward.1} parent=11 // pred_check
          %p446 = pneg %p126
        $region22: #{attention_decoder_forward.1} parent=11 // pred_check_branch
          %448 = sbr.rel (%p446) target = $region24
        $region23: #{attention_decoder_forward.1} parent=11 // pred_region
          _
        $region24: #{attention_decoder_forward.1} parent=11 // pred_fallthru
          _
        // Predicated region
        $region25: #{attention_decoder_forward.1} parent=11 // pred_check
          %p449 = pneg %p147
        $region26: #{attention_decoder_forward.1} parent=11 // pred_check_branch
          %451 = sbr.rel (%p449) target = $region28
        $region27: #{attention_decoder_forward.1} parent=11 // pred_region
          _
        $region28: #{attention_decoder_forward.1} parent=11 // pred_fallthru
          _
        // Predicated region
        $region29: #{attention_decoder_forward.1} parent=11 // pred_check
          %p452 = pneg %p168
        $region30: #{attention_decoder_forward.1} parent=11 // pred_check_branch
          %454 = sbr.rel (%p452) target = $region32
        $region31: #{attention_decoder_forward.1} parent=11 // pred_region
          _
        $region32: #{attention_decoder_forward.1} parent=11 // pred_fallthru
          _
        // Predicated region
        $region33: #{attention_decoder_forward.1} parent=11 // pred_check
          %p455 = pneg %p189
        $region34: #{attention_decoder_forward.1} parent=11 // pred_check_branch
          %457 = sbr.rel (%p455) target = $region36
        $region35: #{attention_decoder_forward.1} parent=11 // pred_region
          _
        $region36: #{attention_decoder_forward.1} parent=11 // pred_fallthru
          _
        // Predicated region
        $region37: #{attention_decoder_forward.1} parent=11 // pred_check
          %p458 = pneg %p210
        $region38: #{attention_decoder_forward.1} parent=11 // pred_check_branch
          %460 = sbr.rel (%p458) target = $region40
        $region39: #{attention_decoder_forward.1} parent=11 // pred_region
          _
        $region40: #{attention_decoder_forward.1} parent=11 // pred_fallthru
          _
        // Predicated region
        $region41: #{attention_decoder_forward.1} parent=11 // pred_check
          %p461 = pneg %p231
        $region42: #{attention_decoder_forward.1} parent=11 // pred_check_branch
          %463 = sbr.rel (%p461) target = $region44
        $region43: #{attention_decoder_forward.1} parent=11 // pred_region
          _
        $region44: #{attention_decoder_forward.1} parent=11 // pred_fallthru
          _
        // Predicated region
        $region45: #{attention_decoder_forward.1} parent=11 // pred_check
          %p464 = pneg %p252
        $region46: #{attention_decoder_forward.1} parent=11 // pred_check_branch
          %466 = sbr.rel (%p464) target = $region48
        $region47: #{attention_decoder_forward.1} parent=11 // pred_region
          _
        $region48: #{attention_decoder_forward.1} parent=11 // pred_fallthru
          _
        // Predicated region
        $region49: #{attention_decoder_forward.1} parent=11 // pred_check
          %p467 = pneg %p273
        $region50: #{attention_decoder_forward.1} parent=11 // pred_check_branch
          %469 = sbr.rel (%p467) target = $region52
        $region51: #{attention_decoder_forward.1} parent=11 // pred_region
          _
        $region52: #{attention_decoder_forward.1} parent=11 // pred_fallthru
          _
        // Predicated region
        $region53: #{attention_decoder_forward.1} parent=11 // pred_check
          %p470 = pneg %p294
        $region54: #{attention_decoder_forward.1} parent=11 // pred_check_branch
          %472 = sbr.rel (%p470) target = $region56
        $region55: #{attention_decoder_forward.1} parent=11 // pred_region
          _
        $region56: #{attention_decoder_forward.1} parent=11 // pred_fallthru
          _
        // Predicated region
        $region57: #{attention_decoder_forward.1} parent=11 // pred_check
          %p473 = pneg %p315
        $region58: #{attention_decoder_forward.1} parent=11 // pred_check_branch
          %475 = sbr.rel (%p473) target = $region60
        $region59: #{attention_decoder_forward.1} parent=11 // pred_region
          _
        $region60: #{attention_decoder_forward.1} parent=11 // pred_fallthru
          _
        // Predicated region
        $region61: #{attention_decoder_forward.1} parent=11 // pred_check
          %p476 = pneg %p336
        $region62: #{attention_decoder_forward.1} parent=11 // pred_check_branch
          %478 = sbr.rel (%p476) target = $region64
        $region63: #{attention_decoder_forward.1} parent=11 // pred_region
          _
        $region64: #{attention_decoder_forward.1} parent=11 // pred_fallthru
          _
        // Predicated region
        $region65: #{attention_decoder_forward.1} parent=11 // pred_check
          %p479 = pneg %p357
        $region66: #{attention_decoder_forward.1} parent=11 // pred_check_branch
          %481 = sbr.rel (%p479) target = $region68
        $region67: #{attention_decoder_forward.1} parent=11 // pred_region
          _
        $region68: #{attention_decoder_forward.1} parent=11 // pred_fallthru
          _
        // Predicated region
        $region69: #{attention_decoder_forward.1} parent=11 // pred_check
          %p482 = pneg %p378
        $region70: #{attention_decoder_forward.1} parent=11 // pred_check_branch
          %484 = sbr.rel (%p482) target = $region72
        $region71: #{attention_decoder_forward.1} parent=11 // pred_region
          _
        $region72: #{attention_decoder_forward.1} parent=11 // pred_fallthru
          _
        // Predicated region
        $region73: #{attention_decoder_forward.1} parent=11 // pred_check
          %p485 = pneg %p399
        $region74: #{attention_decoder_forward.1} parent=11 // pred_check_branch
          %487 = sbr.rel (%p485) target = $region76
        $region75: #{attention_decoder_forward.1} parent=11 // pred_region
          _
        $region76: #{attention_decoder_forward.1} parent=11 // pred_fallthru
          _
      $region12: #{attention_decoder_forward.1} parent=5 // pred_fallthru
        _
      %p488 = scmp.lt.s32.totalorder %s37, 8
      // Predicated region
      $region77: #{attention_decoder_forward.1} parent=5 // pred_check
        %p489 = pneg %p488
      $region78: #{attention_decoder_forward.1} parent=5 // pred_check_branch
        %491 = sbr.rel (%p489) target = $region80
      $region79: #{attention_decoder_forward.1} parent=5 // pred_region
        // Predicated region
        $region81: #{attention_decoder_forward.1} parent=79 // pred_check
          %p492 = pneg %p57
        $region82: #{attention_decoder_forward.1} parent=79 // pred_check_branch
          %494 = sbr.rel (%p492) target = $region84
        $region83: #{attention_decoder_forward.1} parent=79 // pred_region
          %p495 = scmp.lt.s32.totalorder %s37, 7
          %s496 = scalar_select %p495, %s37, 7
          %s497 = smul.addr %s496, 2
          %s498 = scalar_lea.vmem %s1, %s497
        $region84: #{attention_decoder_forward.1} parent=79 // pred_fallthru
          _
      $region80: #{attention_decoder_forward.1} parent=5 // pred_fallthru
        _
      %p499 = scmp.le.s32.totalorder 1, %s37
      %p500 = scmp.lt.s32.totalorder %s37, 9
      %p501 = pnand %p499, %p500
      %p502 = pneg %p501
      // Predicated region
      $region85: #{attention_decoder_forward.1} parent=5 // pred_check
        _
      $region86: #{attention_decoder_forward.1} parent=5 // pred_check_branch
        %504 = sbr.rel (%p501) target = $region88
      $region87: #{attention_decoder_forward.1} parent=5 // pred_region
        %s505 = ssub.s32 %s37, 1
        %p506 = scmp.lt.s32.totalorder %s42, 7
        %s507 = scalar_select %p506, %s42, 7
        %s508 = smul.addr %s507, 2
        %s509 = scalar_lea.vmem %s1, %s508
        %p510 = pneg %p63
        %p511 = pneg %p60
        %p512 = pneg %p84
        %p513 = pneg %p81
        %p514 = pneg %p105
        %p515 = pneg %p102
        %p516 = pneg %p126
        %p517 = pneg %p123
        %p518 = pneg %p147
        %p519 = pneg %p144
        %p520 = pneg %p168
        %p521 = pneg %p165
        %p522 = pneg %p189
        %p523 = pneg %p186
        %p524 = pneg %p210
        %p525 = pneg %p207
        %p526 = pneg %p231
        %p527 = pneg %p228
        %p528 = pneg %p252
        %p529 = pneg %p249
        %p530 = pneg %p273
        %p531 = pneg %p270
        %p532 = pneg %p294
        %p533 = pneg %p291
        %p534 = pneg %p315
        %p535 = pneg %p312
        %p536 = pneg %p336
        %p537 = pneg %p333
        %p538 = pneg %p357
        %p539 = pneg %p354
        %p540 = pneg %p378
        %p541 = pneg %p375
        %p542 = pneg %p399
        %p543 = pneg %p396
        %p544 = pneg %p425
        %p545 = pneg %p422
        %s546 = sand.u32 %s412, 1
        %s547 = scalar_lea.sflag [#allocation8], %s546
        %s548 = sand.u32 %s412, 1
        %s549 = smul.addr %s548, 2
        %s550 = scalar_lea.vmem [#allocation7], %s549
        %p551 = scmp.lt.s32.totalorder %s42, 7
        %s552 = scalar_select %p551, %s42, 7
        %s553 = smul.addr %s552, 2
        %s554 = scalar_lea.vmem %s1, %s553
        %v555 = vld [vmem:[%s554] sm:$0x3]
        %p556 = scmp.eq.s32.totalorder %s42, 0
        // Predicated region
        $region89: #{attention_decoder_forward.1} parent=87 // pred_check
          %p557 = pneg %p556
        $region90: #{attention_decoder_forward.1} parent=87 // pred_check_branch
          %559 = sbr.rel (%p557) target = $region92
        $region91: #{attention_decoder_forward.1} parent=87 // pred_region
          %v560 = vld [vmem:[%s4] sm:$0x3]
          %v561 = vld [vmem:[%s4 + $0x2] sm:$0x3]
          %vm562 = vcmask 254976
          %563 = vst.msk [vmem:[#allocation2] sm:$0x3] %vm562, %v560
          %564 = vst.msk [vmem:[#allocation2 + $0x2] sm:$0x3] %vm562, %v561
          %vm565 = vcmask 1024
          %566 = vst.msk [vmem:[#allocation3] sm:$0x3] %vm565, %v555
        $region92: #{attention_decoder_forward.1} parent=87 // pred_fallthru
          _
        %v567 = vlaneseq
        %v568 = vand.u32 %v567, 127
        %v569 = vld [vmem:[#allocation3] sm:$0x3]
        %570 = vset.pattern.permute.xlu0 0
        %571 = vperm.xlu0 %570, %v569
        %v572 = vpop.permute.xlu0 %571
        %vm573 = vcmp.eq.s32.totalorder %v572, %v568
        %v574 = vsel %vm573, 1, 0
        %v575 = vcvt.s32.f32 %v574
        %v576 = vld [vmem:[%s5] sm:$0xff]
        %v577 = vld [vmem:[%s5 + $0x8] sm:$0xff]
        %vm578 = vcmask 130048
        %v580 = vsel %vm578, %v575, 0
        %582 = vmatpush.msra.mxu0 0.0
        %583 = vmatpush.msra.mxu0 0.0
        %584 = vmatpush.msra.mxu0 0.0
        %585 = vmatpush.msra.mxu0 0.0
        %586 = vmatpush.msra.mxu0 0.0
        %587 = vmatpush.msra.mxu0 0.0
        %588 = vmatpush.msra.mxu0 0.0
        %589 = vmatpush.msra.mxu0 0.0
        %590 = vmatpush.msra.mxu0 0.0
        %591 = vmatpush.msra.mxu0 0.0
        %592 = vmatpush.msra.mxu0 0.0
        %593 = vmatpush.msra.mxu0 0.0
        %594 = vmatpush.msra.mxu0 0.0
        %595 = vmatpush.msra.mxu0 0.0
        %596 = vmatpush.msra.mxu0 %v577
        %597 = vmatpush.msra.mxu0 %v576
        %598 = vmatmul.f32.gmra.mxu0 %v580
        %v599 = vpop.f32.mrf.mxu0
        %v600 = vadd.f32 0.0, %v599
        %601 = vdwg.mxu0
        %s602 = scalar_lea.vmem [#allocation2], 2
        %v603 = vld [vmem:[%s602] sm:$0x3]
        %v604 = vld [vmem:[%s6] sm:$0xff]
        %v605 = vld [vmem:[%s6 + $0x8] sm:$0xff]
        %v606 = vld [vmem:[%s6 + $0x10] sm:$0xff]
        %v607 = vld [vmem:[%s6 + $0x18] sm:$0xff]
        %v608 = vld [vmem:[%s7] sm:$0x1]
        %v610 = vperm.slane %v608, 0
        %vm612 = vcmask 261120
        %v614 = vsel %vm612, %v603, 0
        %616 = vmatpush.msra.mxu0 0.0
        %617 = vmatpush.msra.mxu0 0.0
        %618 = vmatpush.msra.mxu0 0.0
        %619 = vmatpush.msra.mxu0 0.0
        %620 = vmatpush.msra.mxu0 0.0
        %621 = vmatpush.msra.mxu0 0.0
        %622 = vmatpush.msra.mxu0 0.0
        %623 = vmatpush.msra.mxu0 0.0
        %624 = vmatpush.msra.mxu0 0.0
        %625 = vmatpush.msra.mxu0 0.0
        %626 = vmatpush.msra.mxu0 0.0
        %627 = vmatpush.msra.mxu0 0.0
        %628 = vmatpush.msra.mxu0 %v607
        %629 = vmatpush.msra.mxu0 %v606
        %630 = vmatpush.msra.mxu0 %v605
        %631 = vmatpush.msra.mxu0 %v604
        %632 = vmatmul.f32.gmra.mxu0 %v614
        %v633 = vpop.f32.mrf.mxu0
        %v634 = vadd.f32 %v610, %v633
        %635 = vdwg.mxu0
        %v636 = vld [vmem:[%s3] sm:$0xff]
        %v637 = vld [vmem:[%s3 + $0x8] sm:$0xff]
        %v639 = vrot.slane %v634, 1
        %v640 = vperm.slane %v634, 0
        %v641 = vperm.slane %v639, 0
        %v644 = vadd.f32 %v636, %v640
        %v645 = vadd.f32 %v637, %v641
        %v646 = vtanh.pop %v644
        %v647 = vtanh.pop %v645
        %v648 = vld [vmem:[%s8] sm:$0x1]
        %v649 = vld [vmem:[#allocation6] sm:$0x1]
        %651 = vset.pattern.permute.xlu0 0
        %652 = vperm.xlu0 %651, %v649
        %v653 = vpop.permute.xlu0 %652
        %v655 = vperm.slane %v653, 0
        %v657 = vsel %vm612, %v648, 0
        %v660 = vsel %vm612, %v646, 0
        %662 = vmatpush.xpose.msra.mxu0 0.0
        %663 = vmatpush.xpose.msra.mxu0 0.0
        %664 = vmatpush.xpose.msra.mxu0 0.0
        %665 = vmatpush.xpose.msra.mxu0 0.0
        %666 = vmatpush.xpose.msra.mxu0 0.0
        %667 = vmatpush.xpose.msra.mxu0 0.0
        %668 = vmatpush.xpose.msra.mxu0 0.0
        %669 = vmatpush.xpose.msra.mxu0 0.0
        %670 = vmatpush.xpose.msra.mxu0 0.0
        %671 = vmatpush.xpose.msra.mxu0 0.0
        %672 = vmatpush.xpose.msra.mxu0 0.0
        %673 = vmatpush.xpose.msra.mxu0 0.0
        %674 = vmatpush.xpose.msra.mxu0 0.0
        %675 = vmatpush.xpose.msra.mxu0 0.0
        %676 = vmatpush.xpose.msra.mxu0 0.0
        %677 = vmatpush.xpose.msra.mxu0 %v660
        %678 = vmatmul.f32.gmra.mxu0 %v657
        %v679 = vpop.f32.mrf.mxu0
        %v680 = vadd.f32 %v655, %v679
        %681 = vdwg.mxu0
        %v683 = vsel %vm612, %v647, 0
        %685 = vmatpush.xpose.msra.mxu0 0.0
        %686 = vmatpush.xpose.msra.mxu0 0.0
        %687 = vmatpush.xpose.msra.mxu0 0.0
        %688 = vmatpush.xpose.msra.mxu0 0.0
        %689 = vmatpush.xpose.msra.mxu0 0.0
        %690 = vmatpush.xpose.msra.mxu0 0.0
        %691 = vmatpush.xpose.msra.mxu0 0.0
        %692 = vmatpush.xpose.msra.mxu0 0.0
        %693 = vmatpush.xpose.msra.mxu0 0.0
        %694 = vmatpush.xpose.msra.mxu0 0.0
        %695 = vmatpush.xpose.msra.mxu0 0.0
        %696 = vmatpush.xpose.msra.mxu0 0.0
        %697 = vmatpush.xpose.msra.mxu0 0.0
        %698 = vmatpush.xpose.msra.mxu0 0.0
        %699 = vmatpush.xpose.msra.mxu0 0.0
        %700 = vmatpush.xpose.msra.mxu0 %v683
        %701 = vmatmul.f32.gmra.mxu0 %v657
        %v702 = vpop.f32.mrf.mxu0
        %v703 = vadd.f32 %v655, %v702
        %704 = vdwg.mxu0
        %vm705 = vcmask 57344
        %v706 = vsel %vm705, %v680, -inf
        %707 = vmax.xlane.f32.xlu0 %v706
        %v708 = vpop.xlane.xlu0 %707
        %v709 = vsel %vm705, %v703, -inf
        %710 = vmax.xlane.f32.xlu0 %v709
        %v711 = vpop.xlane.xlu0 %710
        %v712 = vsub.f32 %v680, %v708
        %v713 = vsub.f32 %v703, %v711
        %v714 = vmul.f32 %v712, 1.442695
        %v715 = vpow.pop %v714
        %v716 = vmul.f32 %v713, 1.442695
        %v717 = vpow.pop %v716
        %v718 = vsel %vm705, %v715, 0.0
        %719 = vadd.xlane.f32.xlu0 %v718
        %v720 = vpop.xlane.xlu0 %719
        %v721 = vsel %vm705, %v717, 0.0
        %722 = vadd.xlane.f32.xlu0 %v721
        %v723 = vpop.xlane.xlu0 %722
        %v724 = vrcp.pop %v720
        %v725 = vmul.f32 %v720, %v724
        %v726 = vsub.f32 1.0, %v725
        %v727 = vmul.f32 %v724, %v726
        %v728 = vadd.f32 %v724, %v727
        %vm729 = vweird.f32 %v720
        %vm730 = vweird.f32 %v724
        %vm731 = vmor %vm729, %vm730
        %v732 = vsel %vm731, %v724, %v728
        %v733 = vand.u32 2147483647, %v720
        %vm734 = vcmp.eq.f32.partialorder %v733, 8.507059e+37
        %v735 = vand.u32 %v720, 2147483648
        %v736 = vor.u32 1.1754944e-38, %v735
        %v737 = vsel %vm734, %v736, %v732
        %v738 = vmul.f32 %v715, %v737
        %v739 = vrcp.pop %v723
        %v740 = vmul.f32 %v723, %v739
        %v741 = vsub.f32 1.0, %v740
        %v742 = vmul.f32 %v739, %v741
        %v743 = vadd.f32 %v739, %v742
        %vm744 = vweird.f32 %v723
        %vm745 = vweird.f32 %v739
        %vm746 = vmor %vm744, %vm745
        %v747 = vsel %vm746, %v739, %v743
        %v748 = vand.u32 2147483647, %v723
        %vm749 = vcmp.eq.f32.partialorder %v748, 8.507059e+37
        %v750 = vand.u32 %v723, 2147483648
        %v751 = vor.u32 1.1754944e-38, %v750
        %v752 = vsel %vm749, %v751, %v747
        %v753 = vmul.f32 %v717, %v752
        %v754 = vld [vmem:[%s2] sm:$0xff]
        %v755 = vld [vmem:[%s2 + $0x8] sm:$0xff]
        %vm756 = vcmask 64512
        %v758 = vsel %vm756, %v738, 0
        %760 = vmatpush.msra.mxu0 0.0
        %761 = vmatpush.msra.mxu0 0.0
        %762 = vmatpush.msra.mxu0 0.0
        %763 = vmatpush.msra.mxu0 0.0
        %764 = vmatpush.msra.mxu0 0.0
        %765 = vmatpush.msra.mxu0 0.0
        %766 = vmatpush.msra.mxu0 0.0
        %767 = vmatpush.msra.mxu0 0.0
        %768 = vmatpush.msra.mxu0 0.0
        %769 = vmatpush.msra.mxu0 0.0
        %770 = vmatpush.msra.mxu0 0.0
        %771 = vmatpush.msra.mxu0 0.0
        %772 = vmatpush.msra.mxu0 0.0
        %773 = vmatpush.msra.mxu0 0.0
        %774 = vmatpush.msra.mxu0 0.0
        %775 = vmatpush.msra.mxu0 %v754
        %776 = vmatmul.f32.gmra.mxu0 %v758
        %v777 = vpop.f32.mrf.mxu0
        %v778 = vadd.f32 0.0, %v777
        %779 = vdwg.mxu0
        %v781 = vsel %vm756, %v753, 0
        %783 = vmatpush.msra.mxu0 0.0
        %784 = vmatpush.msra.mxu0 0.0
        %785 = vmatpush.msra.mxu0 0.0
        %786 = vmatpush.msra.mxu0 0.0
        %787 = vmatpush.msra.mxu0 0.0
        %788 = vmatpush.msra.mxu0 0.0
        %789 = vmatpush.msra.mxu0 0.0
        %790 = vmatpush.msra.mxu0 0.0
        %791 = vmatpush.msra.mxu0 0.0
        %792 = vmatpush.msra.mxu0 0.0
        %793 = vmatpush.msra.mxu0 0.0
        %794 = vmatpush.msra.mxu0 0.0
        %795 = vmatpush.msra.mxu0 0.0
        %796 = vmatpush.msra.mxu0 0.0
        %797 = vmatpush.msra.mxu0 0.0
        %798 = vmatpush.msra.mxu0 %v755
        %799 = vmatmul.f32.gmra.mxu0 %v781
        %v800 = vpop.f32.mrf.mxu0
        %v801 = vadd.f32 0.0, %v800
        %802 = vdwg.mxu0
        %v803 = vld [vmem:[%s10] sm:$0xff]
        %v804 = vld [vmem:[%s10 + $0x8] sm:$0xff]
        %v805 = vld [vmem:[%s11] sm:$0xff]
        %v806 = vld [vmem:[%s11 + $0x8] sm:$0xff]
        %v807 = vld [vmem:[%s11 + $0x10] sm:$0xff]
        %v808 = vld [vmem:[%s11 + $0x18] sm:$0xff]
        %v811 = vrot.slane %v801, 7
        %vm812 = vcmask 1041409
        %v813 = vsel %vm812, %v811, %v778
        %v814 = vsel %vm612, %v813, 0
        %816 = vmatpush.msra.mxu0 0.0
        %817 = vmatpush.msra.mxu0 0.0
        %818 = vmatpush.msra.mxu0 0.0
        %819 = vmatpush.msra.mxu0 0.0
        %820 = vmatpush.msra.mxu0 0.0
        %821 = vmatpush.msra.mxu0 0.0
        %822 = vmatpush.msra.mxu0 0.0
        %823 = vmatpush.msra.mxu0 0.0
        %824 = vmatpush.msra.mxu0 0.0
        %825 = vmatpush.msra.mxu0 0.0
        %826 = vmatpush.msra.mxu0 0.0
        %827 = vmatpush.msra.mxu0 0.0
        %828 = vmatpush.msra.mxu0 %v808
        %829 = vmatpush.msra.mxu0 %v807
        %830 = vmatpush.msra.mxu0 %v806
        %831 = vmatpush.msra.mxu0 %v805
        %832 = vmatmul.f32.gmra.mxu0 %v814
        %v833 = vpop.f32.mrf.mxu0
        %v834 = vadd.f32 0.0, %v833
        %835 = vdwg.mxu0
        %v837 = vsel %vm578, %v600, 0
        %839 = vmatpush.msra.mxu0 0.0
        %840 = vmatpush.msra.mxu0 0.0
        %841 = vmatpush.msra.mxu0 0.0
        %842 = vmatpush.msra.mxu0 0.0
        %843 = vmatpush.msra.mxu0 0.0
        %844 = vmatpush.msra.mxu0 0.0
        %845 = vmatpush.msra.mxu0 0.0
        %846 = vmatpush.msra.mxu0 0.0
        %847 = vmatpush.msra.mxu0 0.0
        %848 = vmatpush.msra.mxu0 0.0
        %849 = vmatpush.msra.mxu0 0.0
        %850 = vmatpush.msra.mxu0 0.0
        %851 = vmatpush.msra.mxu0 0.0
        %852 = vmatpush.msra.mxu0 0.0
        %853 = vmatpush.msra.mxu0 %v804
        %854 = vmatpush.msra.mxu0 %v803
        %855 = vmatmul.f32.gmra.mxu0 %v837
        %v856 = vpop.f32.mrf.mxu0
        %v857 = vadd.f32 %v834, %v856
        %858 = vdwg.mxu0
        %v859 = vld [vmem:[%s14] sm:$0x1]
        %v861 = vperm.slane %v859, 0
        %v863 = vadd.f32 %v857, %v861
        %v864 = vld [vmem:[#allocation2] sm:$0x3]
        %v865 = vld [vmem:[%s13] sm:$0xff]
        %v866 = vld [vmem:[%s13 + $0x8] sm:$0xff]
        %v867 = vld [vmem:[%s13 + $0x10] sm:$0xff]
        %v868 = vld [vmem:[%s13 + $0x18] sm:$0xff]
        %v870 = vsel %vm612, %v864, 0
        %872 = vmatpush.msra.mxu0 0.0
        %873 = vmatpush.msra.mxu0 0.0
        %874 = vmatpush.msra.mxu0 0.0
        %875 = vmatpush.msra.mxu0 0.0
        %876 = vmatpush.msra.mxu0 0.0
        %877 = vmatpush.msra.mxu0 0.0
        %878 = vmatpush.msra.mxu0 0.0
        %879 = vmatpush.msra.mxu0 0.0
        %880 = vmatpush.msra.mxu0 0.0
        %881 = vmatpush.msra.mxu0 0.0
        %882 = vmatpush.msra.mxu0 0.0
        %883 = vmatpush.msra.mxu0 0.0
        %884 = vmatpush.msra.mxu0 %v868
        %885 = vmatpush.msra.mxu0 %v867
        %886 = vmatpush.msra.mxu0 %v866
        %887 = vmatpush.msra.mxu0 %v865
        %888 = vmatmul.f32.gmra.mxu0 %v870
        %v889 = vpop.f32.mrf.mxu0
        %v890 = vadd.f32 0.0, %v889
        %891 = vdwg.mxu0
        %v892 = vadd.f32 %v863, %v890
        %v893 = vld [vmem:[%s15] sm:$0x1]
        %v895 = vperm.slane %v893, 0
        %v897 = vadd.f32 %v892, %v895
        %v898 = vtanh.pop %v897
        %vm899 = vcmask 254976
        %900 = vst.msk [vmem:[#allocation2] sm:$0x3] %vm899, %v898
        %v901 = vld [vmem:[%s12] sm:$0xff]
        %v902 = vld [vmem:[%s12 + $0x8] sm:$0xff]
        %v903 = vld [vmem:[%s12 + $0x10] sm:$0xff]
        %v904 = vld [vmem:[%s12 + $0x18] sm:$0xff]
        %s905 = scalar_lea.vmem %s14, 1
        %v906 = vld [vmem:[%s905] sm:$0x1]
        %v908 = vperm.slane %v906, 0
        %v911 = vsel %vm612, %v898, 0
        %913 = vmatpush.msra.mxu0 0.0
        %914 = vmatpush.msra.mxu0 0.0
        %915 = vmatpush.msra.mxu0 0.0
        %916 = vmatpush.msra.mxu0 0.0
        %917 = vmatpush.msra.mxu0 0.0
        %918 = vmatpush.msra.mxu0 0.0
        %919 = vmatpush.msra.mxu0 0.0
        %920 = vmatpush.msra.mxu0 0.0
        %921 = vmatpush.msra.mxu0 0.0
        %922 = vmatpush.msra.mxu0 0.0
        %923 = vmatpush.msra.mxu0 0.0
        %924 = vmatpush.msra.mxu0 0.0
        %925 = vmatpush.msra.mxu0 %v904
        %926 = vmatpush.msra.mxu0 %v903
        %927 = vmatpush.msra.mxu0 %v902
        %928 = vmatpush.msra.mxu0 %v901
        %929 = vmatmul.f32.gmra.mxu0 %v911
        %v930 = vpop.f32.mrf.mxu0
        %v931 = vadd.f32 %v908, %v930
        %932 = vdwg.mxu0
        %v933 = vld [vmem:[%s602] sm:$0x3]
        %s934 = scalar_lea.vmem %s13, 32
        %v935 = vld [vmem:[%s934] sm:$0xff]
        %v936 = vld [vmem:[%s934 + $0x8] sm:$0xff]
        %v937 = vld [vmem:[%s934 + $0x10] sm:$0xff]
        %v938 = vld [vmem:[%s934 + $0x18] sm:$0xff]
        %v940 = vsel %vm612, %v933, 0
        %942 = vmatpush.msra.mxu0 0.0
        %943 = vmatpush.msra.mxu0 0.0
        %944 = vmatpush.msra.mxu0 0.0
        %945 = vmatpush.msra.mxu0 0.0
        %946 = vmatpush.msra.mxu0 0.0
        %947 = vmatpush.msra.mxu0 0.0
        %948 = vmatpush.msra.mxu0 0.0
        %949 = vmatpush.msra.mxu0 0.0
        %950 = vmatpush.msra.mxu0 0.0
        %951 = vmatpush.msra.mxu0 0.0
        %952 = vmatpush.msra.mxu0 0.0
        %953 = vmatpush.msra.mxu0 0.0
        %954 = vmatpush.msra.mxu0 %v938
        %955 = vmatpush.msra.mxu0 %v937
        %956 = vmatpush.msra.mxu0 %v936
        %957 = vmatpush.msra.mxu0 %v935
        %958 = vmatmul.f32.gmra.mxu0 %v940
        %v959 = vpop.f32.mrf.mxu0
        %v960 = vadd.f32 0.0, %v959
        %961 = vdwg.mxu0
        %v962 = vadd.f32 %v931, %v960
        %s963 = scalar_lea.vmem %s15, 1
        %v964 = vld [vmem:[%s963] sm:$0x1]
        %v966 = vperm.slane %v964, 0
        %v968 = vadd.f32 %v962, %v966
        %v969 = vtanh.pop %v968
        %970 = vst.msk [vmem:[%s602] sm:$0x3] %vm899, %v969
        %v971 = vld [vmem:[%s16] sm:$0xff]
        %v972 = vld [vmem:[%s16 + $0x8] sm:$0xff]
        %v973 = vld [vmem:[%s16 + $0x10] sm:$0xff]
        %v974 = vld [vmem:[%s16 + $0x18] sm:$0xff]
        %v975 = vld [vmem:[%s17] sm:$0x1]
        %v977 = vperm.slane %v975, 0
        %v980 = vsel %vm612, %v969, 0
        %982 = vmatpush.msra.mxu0 0.0
        %983 = vmatpush.msra.mxu0 0.0
        %984 = vmatpush.msra.mxu0 0.0
        %985 = vmatpush.msra.mxu0 0.0
        %986 = vmatpush.msra.mxu0 0.0
        %987 = vmatpush.msra.mxu0 0.0
        %988 = vmatpush.msra.mxu0 0.0
        %989 = vmatpush.msra.mxu0 0.0
        %990 = vmatpush.msra.mxu0 0.0
        %991 = vmatpush.msra.mxu0 0.0
        %992 = vmatpush.msra.mxu0 0.0
        %993 = vmatpush.msra.mxu0 0.0
        %994 = vmatpush.msra.mxu0 %v974
        %995 = vmatpush.msra.mxu0 %v973
        %996 = vmatpush.msra.mxu0 %v972
        %997 = vmatpush.msra.mxu0 %v971
        %998 = vmatmul.f32.gmra.mxu0 %v980
        %v999 = vpop.f32.mrf.mxu0
        %v1000 = vadd.f32 %v977, %v999
        %1001 = vdwg.mxu0
        %vm1002 = vcmask 123904
        %1003 = vst.msk [vmem:[%s550] sm:$0x3] %vm1002, %v1000
        %v1004 = vsel %vm1002, %v1000, -inf
        %1005 = vmax.xlane.f32.xlu0 %v1004
        %v1006 = vpop.xlane.xlu0 %1005
        %vm1007 = vcmp.eq.f32.partialorder %v1000, %v1006
        %v1008 = vsel %vm1007, %v568, 16
        %v1009 = vsel %vm1002, %v1008, 2147483647
        %v1010 = vand.u32 %v1009, 65535
        %v1011 = vshra.s32 %v1009, 16
        %v1012 = vcvt.s32.f32 %v1010
        %v1013 = vcvt.s32.f32 %v1011
        %1014 = vmin.xlane.f32.xlu0 %v1013
        %v1015 = vpop.xlane.xlu0 %1014
        %vm1016 = vcmp.eq.f32.partialorder %v1013, %v1015
        %v1017 = vsel %vm1016, %v1012, inf
        %1018 = vmin.xlane.f32.xlu0 %v1017
        %v1019 = vpop.xlane.xlu0 %1018
        %v1020 = vcvt.f32.s32 %v1019
        %v1021 = vcvt.f32.s32 %v1015
        %v1022 = vshll.u32 %v1021, 16
        %v1023 = vadd.s32 %v1022, %v1020
        %s1024 = sld [smem:[#allocation5 + %s42]]
        %p1025 = scmp.gt.s32.totalorder %s1024, 0
        // Predicated region
        $region93: #{attention_decoder_forward.1} parent=87 // pred_check
          %p1026 = pneg %p1025
        $region94: #{attention_decoder_forward.1} parent=87 // pred_check_branch
          %1028 = sbr.rel (%p1026) target = $region96
        $region95: #{attention_decoder_forward.1} parent=87 // pred_region
          %vm1029 = vcmask 1024
          %1030 = vst.msk [vmem:[#allocation3] sm:$0x3] %vm1029, %v555
        $region96: #{attention_decoder_forward.1} parent=87 // pred_fallthru
          _
        %p1031 = scmp.eq.s32.totalorder %s1024, 0
        // Predicated region
        $region97: #{attention_decoder_forward.1} parent=87 // pred_check
          %p1032 = pneg %p1031
        $region98: #{attention_decoder_forward.1} parent=87 // pred_check_branch
          %1034 = sbr.rel (%p1032) target = $region100
        $region99: #{attention_decoder_forward.1} parent=87 // pred_region
          %vm1035 = vcmask 1024
          %1036 = vst.msk [vmem:[#allocation3] sm:$0x3] %vm1035, %v1023
        $region100: #{attention_decoder_forward.1} parent=87 // pred_fallthru
          _
        %s1037 = sand.u32 %s412, 1
        %s1038 = scalar_lea.sflag [#allocation8], %s1037
        %s1039 = sand.u32 %s412, 1
        %s1040 = smul.addr %s1039, 2
        %s1041 = scalar_lea.vmem [#allocation7], %s1040
        // Predicated region
        $region101: #{attention_decoder_forward.1} parent=87 // pred_check
          %p1042 = pneg %p422
        $region102: #{attention_decoder_forward.1} parent=87 // pred_check_branch
          %1044 = sbr.rel (%p1042) target = $region104
        $region103: #{attention_decoder_forward.1} parent=87 // pred_region
          %1046 = vsyncadd %s1038, 0
          %s1047 = smul.addr %s42, 2
          %s1048 = scalar_lea.hbm %s18, %s1047
          %s1050 = sshll.u32 %s1041, 4
          %s1051 = int_to_ptr.vmem [resolvable:$true] %s1050
          %s1052 = sshll.u32 %s1048, 4
          %s1053 = int_to_ptr.hbm [resolvable:$true] %s1052
          %1055 = dma.vmem_to_hbm [thread:$0]  %s1051, 32, %s1053, %s1038
        $region104: #{attention_decoder_forward.1} parent=87 // pred_fallthru
          _
      $region88: #{attention_decoder_forward.1} parent=5 // pred_fallthru
        _
      %p1056 = scmp.le.s32.totalorder 2, %s37
      // Predicated region
      $region105: #{attention_decoder_forward.1} parent=5 // pred_check
        %p1057 = pneg %p1056
      $region106: #{attention_decoder_forward.1} parent=5 // pred_check_branch
        %1059 = sbr.rel (%p1057) target = $region108
      $region107: #{attention_decoder_forward.1} parent=5 // pred_region
        %s1060 = ssub.s32 %s37, 2
        // Predicated region
        $region109: #{attention_decoder_forward.1} parent=107 // pred_check
          %p1061 = pneg %p428
        $region110: #{attention_decoder_forward.1} parent=107 // pred_check_branch
          %1063 = sbr.rel (%p1061) target = $region112
        $region111: #{attention_decoder_forward.1} parent=107 // pred_region
          %s1064 = sand.u32 %s413, 1
          %s1065 = scalar_lea.sflag [#allocation8], %s1064
          %s1066 = sand.u32 %s413, 1
          %s1067 = smul.addr %s1066, 2
          %s1068 = scalar_lea.vmem [#allocation7], %s1067
          %1070 = dma.done %s1065, 32
        $region112: #{attention_decoder_forward.1} parent=107 // pred_fallthru
          _
      $region108: #{attention_decoder_forward.1} parent=5 // pred_fallthru
        _
    $region6: #{attention_decoder_forward.1} parent=1 // loop_footer
      %s41 = sadd.s32 1, %s37
    $region7: #{attention_decoder_forward.1} parent=1 // loop_footer_branch
      %36 = sbr.rel target = $region3
    $region8: #{attention_decoder_forward.1} parent=1 // loop_exit
      _
    %1071 = vsyncpa [#allocation8], 1
    %s1072 = scalar_lea.sflag [#allocation8], 1
    %1073 = vsyncpa %s1072, 1

</llo_original>
